<compile_context>
chip_gen: v5e
topology: v5e:2x2
jax: 0.10.0
libtpu: 0.0.40
codegen_flags: <defaults>
</compile_context>

<pallas_src>
import math
import jax
import jax.numpy as jnp
from jax.experimental import pallas as pl
from jax.experimental.pallas import tpu as pltpu

BN_EPS = 1e-5


# ---------------------------------------------------------------------------
# Pallas kernels
# ---------------------------------------------------------------------------
def sa1_mlp_max_kernel(g_ref,
                       w1_ref, b1_ref,
                       w2_ref, b2_ref,
                       w3_ref, b3_ref,
                       out_ref):
    """Set-abstraction shared MLP: 3x (conv1x1 -> folded-BN bias -> ReLU),
    max-pooled over the neighbour axis K (folded into the block).

    g_ref is (tile_m*K, Cin) bf16; the layer-3 bias+ReLU is applied AFTER the
    max over K (valid since ReLU is monotone and the bias is K-invariant)."""
    rows, _ = g_ref.shape
    tm = out_ref.shape[0]
    K = rows // tm
    x = g_ref[...]                                            # bf16 (tm*K, Cin)
    h = jnp.dot(x, w1_ref[...], preferred_element_type=jnp.float32)
    h = jnp.maximum(h + b1_ref[...], 0.0)
    h = jnp.dot(h.astype(jnp.bfloat16), w2_ref[...],
                preferred_element_type=jnp.float32)
    h = jnp.maximum(h + b2_ref[...], 0.0)
    h = jnp.dot(h.astype(jnp.bfloat16), w3_ref[...],
                preferred_element_type=jnp.float32)           # (tm*K, Cout)
    hmax = jnp.max(h.reshape(tm, K, -1), axis=1)              # (tm, Cout)
    out_ref[...] = jnp.maximum(hmax + b3_ref[...], 0.0).astype(out_ref.dtype)


def tail_kernel(xyz_ref, feat_ref,
                w1x_ref, w1f_ref, b1_ref, w2_ref, b2_ref, w3_ref, b3_ref,
                gw1_ref, gb1_ref, gw2_ref, gb2_ref,
                out_ref):
    """Fused SA2 (group-all shared MLP + max over points) and global MLP
    (2x Linear -> folded-BN bias -> ReLU).  Dropout is identity in eval.

    The first SA2 contraction is split into dot(feat, w1[3:]) + dot(xyz, w1[:3])
    so the concat([xyz, feat]) tensor is never materialized."""
    B, S, _ = feat_ref.shape
    feat = feat_ref[...].reshape(B * S, -1)                   # bf16 (B*S, 128)
    xyzc = xyz_ref[...].reshape(B * S, -1).astype(jnp.bfloat16)  # (B*S, 3)
    h = jnp.dot(feat, w1f_ref[...], preferred_element_type=jnp.float32)
    h = h + jnp.dot(xyzc, w1x_ref[...], preferred_element_type=jnp.float32)
    h = jnp.maximum(h + b1_ref[...], 0.0)
    h = jnp.dot(h.astype(jnp.bfloat16), w2_ref[...],
                preferred_element_type=jnp.float32)
    h = jnp.maximum(h + b2_ref[...], 0.0)
    h = jnp.dot(h.astype(jnp.bfloat16), w3_ref[...],
                preferred_element_type=jnp.float32)           # (B*S, 128)
    # Max over the (single) group; layer-3 bias+ReLU deferred past the max.
    hmax = jnp.max(h.reshape(B, S, -1), axis=1)               # (B, 128)
    feat_g = jnp.maximum(hmax + b3_ref[...], 0.0)
    # torch.max(feature, 2) on a single group (B,128,1) is the identity here.
    g = jnp.dot(feat_g.astype(jnp.bfloat16), gw1_ref[...],
                preferred_element_type=jnp.float32)
    g = jnp.maximum(g + gb1_ref[...], 0.0)
    g = jnp.dot(g.astype(jnp.bfloat16), gw2_ref[...],
                preferred_element_type=jnp.float32)
    g = jnp.maximum(g + gb2_ref[...], 0.0)
    out_ref[...] = g.astype(out_ref.dtype)


# ---------------------------------------------------------------------------
# pallas_call wrappers
# ---------------------------------------------------------------------------
def _pick_tile_m(M, K, max_rows=8192, min_steps=4):
    """Pick a tile over the centroid axis M such that:
      * the grid has >= min_steps steps when M allows (v7x megacore sharding
        + pipeline steady state),
      * tile_m*K input rows stay within a VMEM-friendly budget (128 MiB on
        v5e/v6e; bf16 input halves the double-buffered term for v7x's 64 MiB),
      * the (tile_m, 128) bf16 output block stays sublane-aligned."""
    divisors = sorted({d for d in range(1, M + 1) if M % d == 0}, reverse=True)
    aligned = [d for d in divisors if d % 16 == 0]
    cands = aligned if aligned else [M]          # odd/small M: one full block
    for d in cands:
        if M // d >= min_steps and d * K <= max_rows:
            return d
    for d in cands:
        if d * K <= max_rows:
            return d
    return cands[-1]


def sa1_mlp_max(grouped2d, K, weights, biases):
    """grouped2d: (M*K, Cin) bf16 -> (M, C_out) bf16 after shared MLP + max."""
    MK, Cin = grouped2d.shape
    M = MK // K
    C_out = weights[-1].shape[1]
    tile_m = _pick_tile_m(M, K)
    assert M % tile_m == 0

    in_specs = [pl.BlockSpec((tile_m * K, Cin), lambda i: (i, 0))]
    flat = [grouped2d]
    for w, b in zip(weights, biases):
        in_specs += [pl.BlockSpec(w.shape, lambda i: (0, 0)),
                     pl.BlockSpec(b.shape, lambda i: (0, 0))]
        flat += [w, b]

    return pl.pallas_call(
        sa1_mlp_max_kernel,
        out_shape=jax.ShapeDtypeStruct((M, C_out), jnp.bfloat16),
        grid_spec=pltpu.PrefetchScalarGridSpec(
            num_scalar_prefetch=0,
            grid=(M // tile_m,),
            in_specs=in_specs,
            out_specs=pl.BlockSpec((tile_m, C_out), lambda i: (i, 0))),
        compiler_params=pltpu.CompilerParams(
            dimension_semantics=("parallel",)),
    )(*flat)


def sa2_and_global_mlp(xyz1, feat1, sa2_params, global_params):
    """xyz1 (B,S,3) f32 + feat1 (B,S,128) bf16 -> (B, num_global_out) via the
    fused SA2 (group-all) + global MLP kernel.  The whole tail is tiny, so it
    is one grid step."""
    B, S, _ = feat1.shape
    ws2, bs2 = sa2_params
    wsg, bsg = global_params
    C_out = wsg[-1].shape[1]

    w1 = ws2[0]                         # (3 + 128, 128), bf16
    w1_xyz, w1_feat = w1[:3], w1[3:]    # split the unaligned 131-wide contraction

    flat = [xyz1, feat1,
            w1_xyz, w1_feat, bs2[0],
            ws2[1], bs2[1], ws2[2], bs2[2],
            wsg[0], bsg[0], wsg[1], bsg[1]]
    in_specs = [pl.BlockSpec(xyz1.shape, lambda i: (0, 0, 0)),
                pl.BlockSpec(feat1.shape, lambda i: (0, 0, 0))]
    for a in flat[2:]:
        in_specs.append(pl.BlockSpec(a.shape, lambda i: (0, 0)))

    # TODO(synk): if B*S1 grows, give this a parallel row-tile grid axis with a
    # pl.when-finalized per-B max instead of grid=(1,) (v7x second TC).
    return pl.pallas_call(
        tail_kernel,
        out_shape=jax.ShapeDtypeStruct((B, C_out), jnp.float32),
        grid_spec=pltpu.PrefetchScalarGridSpec(
            num_scalar_prefetch=0,
            grid=(1,),
            in_specs=in_specs,
            out_specs=pl.BlockSpec((B, C_out), lambda i: (0, 0))),
    )(*flat)


# ---------------------------------------------------------------------------
# JAX glue: sampling / grouping (data-dependent indexing)
# ---------------------------------------------------------------------------
def gather_points(x, idx):
    # x: (B, N, C); idx: (B, ...) int32 -> (B, ..., C)
    return jax.vmap(lambda xb, ib: xb[ib])(x, idx)


def farthest_point_sample(xyz, num_samples):
    # TODO(synk): iterative, data-dependent FPS has no clean Pallas equivalent;
    # kept in plain JAX (lax.fori_loop) — it is latency-bound at large S.
    B, N, _ = xyz.shape

    def body(i, state):
        dists, farthest, idxs = state
        idxs = idxs.at[:, i].set(farthest)
        centroid = gather_points(xyz, farthest[:, None])        # (B, 1, 3)
        d = jnp.sum((xyz - centroid) ** 2, axis=-1)              # (B, N)
        dists = jnp.minimum(dists, d)
        farthest = jnp.argmax(dists, axis=-1).astype(jnp.int32)
        return dists, farthest, idxs

    init = (jnp.full((B, N), 1e10, xyz.dtype),
            jnp.zeros((B,), jnp.int32),
            jnp.zeros((B, num_samples), jnp.int32))
    _, _, idxs = jax.lax.fori_loop(0, num_samples, body, init)
    return idxs


def ball_query(xyz, centroids, radius, k):
    # First k in-radius neighbour indices per centroid, padded with the first
    # valid index (PointNet2 ball-query semantics).  Uses top_k over negated
    # index keys instead of a full sort over N.
    B, N, _ = xyz.shape
    d2 = jnp.sum((centroids[:, :, None, :] - xyz[:, None, :, :]) ** 2, -1)
    valid = d2 < radius * radius
    keys = jnp.where(valid, -jnp.arange(N, dtype=jnp.int32)[None, None, :],
                     jnp.int32(-N))
    top = jax.lax.top_k(keys, k)[0]                # descending -> ascending idx
    idx = -top                                     # invalid slots become N
    first = idx[:, :, :1]
    idx = jnp.where(idx == N, first, idx)
    idx = jnp.where(idx == N, 0, idx)
    return idx.astype(jnp.int32)


# ---------------------------------------------------------------------------
# Deterministic parameter init (xavier-uniform weights, BN folded in eval mode)
# ---------------------------------------------------------------------------
def make_layer_params(key, cin, cout):
    kw, kb = jax.random.split(key)
    bound = math.sqrt(6.0 / (cin + cout))
    w = jax.random.uniform(kw, (cin, cout), jnp.float32, -bound, bound)
    bb = 1.0 / math.sqrt(cin)
    conv_bias = jax.random.uniform(kb, (1, cout), jnp.float32, -bb, bb)
    # BatchNorm (eval, fresh stats: mean=0, var=1, gamma=1, beta=0) folded into
    # the weight columns: w' = w * 1/sqrt(var+eps), b' = conv_bias * scale.
    # TODO(synk): for pretrained weights use scale = gamma/sqrt(running_var+eps)
    # and bias = beta + (conv_bias - running_mean)*scale.
    scale = 1.0 / math.sqrt(1.0 + BN_EPS)
    w_folded = (w * scale).astype(jnp.bfloat16)   # bf16 matmul operands (MXU-native)
    bias = conv_bias * scale                      # bias/elementwise stay f32
    return w_folded, bias


def init_params(key, in_channels=3,
                sa_channels=((64, 64, 128), (128, 128, 128)),
                global_channels=(128, 64), use_xyz=True):
    params = {"sa": [], "global": None}
    keys = jax.random.split(key, 16)
    kidx = 0
    feat_c = in_channels - 3
    for chans in sa_channels:
        cin = feat_c + (3 if use_xyz else 0)
        ws, bs = [], []
        for c in chans:
            w, b = make_layer_params(keys[kidx], cin, c)
            kidx += 1
            ws.append(w); bs.append(b)
            cin = c
        params["sa"].append((ws, bs))
        feat_c = chans[-1]
    cin = feat_c
    ws, bs = [], []
    for c in global_channels:
        w, b = make_layer_params(keys[kidx], cin, c)
        kidx += 1
        ws.append(w); bs.append(b)
        cin = c
    params["global"] = (ws, bs)
    return params


# ---------------------------------------------------------------------------
# Full forward pass
# ---------------------------------------------------------------------------
def pointnet2_ssg_cls_forward(points, params,
                              num_centroids=(64, 0), radius=(0.2, -1.0),
                              num_neighbours=(32, -1)):
    # points: (B, C_in, N) in the PyTorch layout; C_in == 3 (xyz only) here.
    B, C_in, N = points.shape
    xyz = jnp.transpose(points[:, :3, :], (0, 2, 1))                 # (B, N, 3)
    feature = (jnp.transpose(points[:, 3:, :], (0, 2, 1))
               if C_in > 3 else None)

    # --- SA module 1: FPS + ball query + group (JAX), shared MLP + max (Pallas)
    # TODO(synk): the neighbour gather could be fused into the kernel via
    # scalar-prefetched nbr_idx + pl.Element row blocks at larger problem sizes.
    S1, K1 = num_centroids[0], num_neighbours[0]
    fps_idx = farthest_point_sample(xyz, S1)                          # (B, S1)
    new_xyz = gather_points(xyz, fps_idx)                             # (B, S1, 3)
    nbr_idx = ball_query(xyz, new_xyz, radius[0], K1)                 # (B, S1, K1)
    grouped_xyz = gather_points(xyz, nbr_idx) - new_xyz[:, :, None, :]
    if feature is not None:
        grouped = jnp.concatenate(
            [grouped_xyz, gather_points(feature, nbr_idx)], axis=-1)
    else:
        grouped = grouped_xyz                                         # (B, S1, K1, 3)
    M = B * S1
    Cg = grouped.shape[-1]
    # bf16 on the host: halves the dominant HBM->VMEM stream; pre-flattened so
    # the kernel block is a clean 2-D (tile_m*K, Cin) slab.
    g1 = grouped.reshape(M * K1, Cg).astype(jnp.bfloat16)
    ws, bs = params["sa"][0]
    feat1 = sa1_mlp_max(g1, K1, ws, bs)                               # (M, 128) bf16
    feat1 = feat1.reshape(B, S1, -1)
    xyz1 = new_xyz

    # --- SA module 2 (group-all around origin) + global MLP, fused in one call.
    # xyz/feat passed separately; the concat never hits HBM.
    return sa2_and_global_mlp(xyz1, feat1, params["sa"][1], params["global"])


# ---------------------------------------------------------------------------
if __name__ == "__main__":
    key = jax.random.PRNGKey(0)
    kparam, kdata = jax.random.split(key)

    B, N = 2, 128
    points = jax.random.uniform(kdata, (B, 3, N), jnp.float32)        # unit cube
    params = init_params(kparam)

    out = pointnet2_ssg_cls_forward(points, params)
    out = jax.block_until_ready(out)
    assert out.shape == (B, 64) and out.dtype == jnp.float32, (out.shape, out.dtype)
    print("KERNEL_OK")
</pallas_src>

<mosaic_0001>
module attributes {stable_mosaic.version = 11 : i64} {
  func.func @sa1_mlp_max_kernel(%arg0: i32, %arg1: memref<1024x3xbf16, #tpu.memory_space<vmem>>, %arg2: memref<3x64xbf16, #tpu.memory_space<vmem>>, %arg3: memref<1x64xf32, #tpu.memory_space<vmem>>, %arg4: memref<64x64xbf16, #tpu.memory_space<vmem>>, %arg5: memref<1x64xf32, #tpu.memory_space<vmem>>, %arg6: memref<64x128xbf16, #tpu.memory_space<vmem>>, %arg7: memref<1x128xf32, #tpu.memory_space<vmem>>, %arg8: memref<32x128xbf16, #tpu.memory_space<vmem>>) attributes {dimension_semantics = [#tpu.dimension_semantics<parallel>], iteration_bounds = array<i64: 4>, scalar_prefetch = 0 : i64, scratch_operands = 0 : i64, tpu.core_type = #tpu.core_type<tc>, window_params = [{transform_indices = @transform_0, window_bounds = array<i64: 1024, 3>}, {pipeline_mode = #tpu.pipeline_mode<synchronous>, transform_indices = @transform_1, window_bounds = array<i64: 3, 64>}, {pipeline_mode = #tpu.pipeline_mode<synchronous>, transform_indices = @transform_2, window_bounds = array<i64: 1, 64>}, {pipeline_mode = #tpu.pipeline_mode<synchronous>, transform_indices = @transform_3, window_bounds = array<i64: 64, 64>}, {pipeline_mode = #tpu.pipeline_mode<synchronous>, transform_indices = @transform_4, window_bounds = array<i64: 1, 64>}, {pipeline_mode = #tpu.pipeline_mode<synchronous>, transform_indices = @transform_5, window_bounds = array<i64: 64, 128>}, {pipeline_mode = #tpu.pipeline_mode<synchronous>, transform_indices = @transform_6, window_bounds = array<i64: 1, 128>}, {transform_indices = @transform_7, window_bounds = array<i64: 32, 128>}]} {
    %c0 = arith.constant 0 : index
    %c0_0 = arith.constant 0 : index
    %0 = vector.load %arg1[%c0, %c0_0] : memref<1024x3xbf16, #tpu.memory_space<vmem>>, vector<1024x3xbf16>
    %c0_1 = arith.constant 0 : index
    %c0_2 = arith.constant 0 : index
    %1 = vector.load %arg2[%c0_1, %c0_2] : memref<3x64xbf16, #tpu.memory_space<vmem>>, vector<3x64xbf16>
    %cst = arith.constant dense<0.000000e+00> : vector<1024x64xf32>
    %2 = tpu.matmul %0, %1, %cst {dimension_numbers = #tpu.dot_dimension_numbers<[1], [0], [0], [1], [0, 0, 1, 1], [], []>} : vector<1024x3xbf16>, vector<3x64xbf16>, vector<1024x64xf32> -> vector<1024x64xf32>
    %c0_3 = arith.constant 0 : index
    %c0_4 = arith.constant 0 : index
    %3 = vector.load %arg3[%c0_3, %c0_4] : memref<1x64xf32, #tpu.memory_space<vmem>>, vector<1x64xf32>
    %4 = vector.broadcast %3 : vector<1x64xf32> to vector<1024x64xf32>
    %5 = arith.addf %2, %4 : vector<1024x64xf32>
    %cst_5 = arith.constant 0.000000e+00 : f32
    %6 = vector.broadcast %cst_5 : f32 to vector<1024x64xf32>
    %7 = arith.maximumf %5, %6 : vector<1024x64xf32>
    %8 = arith.truncf %7 : vector<1024x64xf32> to vector<1024x64xbf16>
    %c0_6 = arith.constant 0 : index
    %c0_7 = arith.constant 0 : index
    %9 = vector.load %arg4[%c0_6, %c0_7] : memref<64x64xbf16, #tpu.memory_space<vmem>>, vector<64x64xbf16>
    %cst_8 = arith.constant dense<0.000000e+00> : vector<1024x64xf32>
    %10 = tpu.matmul %8, %9, %cst_8 {dimension_numbers = #tpu.dot_dimension_numbers<[1], [0], [0], [1], [0, 0, 1, 1], [], []>} : vector<1024x64xbf16>, vector<64x64xbf16>, vector<1024x64xf32> -> vector<1024x64xf32>
    %c0_9 = arith.constant 0 : index
    %c0_10 = arith.constant 0 : index
    %11 = vector.load %arg5[%c0_9, %c0_10] : memref<1x64xf32, #tpu.memory_space<vmem>>, vector<1x64xf32>
    %12 = vector.broadcast %11 : vector<1x64xf32> to vector<1024x64xf32>
    %13 = arith.addf %10, %12 : vector<1024x64xf32>
    %cst_11 = arith.constant 0.000000e+00 : f32
    %14 = vector.broadcast %cst_11 : f32 to vector<1024x64xf32>
    %15 = arith.maximumf %13, %14 : vector<1024x64xf32>
    %16 = arith.truncf %15 : vector<1024x64xf32> to vector<1024x64xbf16>
    %c0_12 = arith.constant 0 : index
    %c0_13 = arith.constant 0 : index
    %17 = vector.load %arg6[%c0_12, %c0_13] : memref<64x128xbf16, #tpu.memory_space<vmem>>, vector<64x128xbf16>
    %cst_14 = arith.constant dense<0.000000e+00> : vector<1024x128xf32>
    %18 = tpu.matmul %16, %17, %cst_14 {dimension_numbers = #tpu.dot_dimension_numbers<[1], [0], [0], [1], [0, 0, 1, 1], [], []>} : vector<1024x64xbf16>, vector<64x128xbf16>, vector<1024x128xf32> -> vector<1024x128xf32>
    %19 = vector.shape_cast %18 : vector<1024x128xf32> to vector<32x32x128xf32>
    %cst_15 = arith.constant dense<0xFF800000> : vector<32x128xf32>
    %20 = vector.multi_reduction <maximumf>, %19, %cst_15 [1] : vector<32x32x128xf32> to vector<32x128xf32>
    %c0_16 = arith.constant 0 : index
    %c0_17 = arith.constant 0 : index
    %21 = vector.load %arg7[%c0_16, %c0_17] : memref<1x128xf32, #tpu.memory_space<vmem>>, vector<1x128xf32>
    %22 = vector.broadcast %21 : vector<1x128xf32> to vector<32x128xf32>
    %23 = arith.addf %20, %22 : vector<32x128xf32>
    %cst_18 = arith.constant 0.000000e+00 : f32
    %24 = vector.broadcast %cst_18 : f32 to vector<32x128xf32>
    %25 = arith.maximumf %23, %24 : vector<32x128xf32>
    %26 = arith.truncf %25 : vector<32x128xf32> to vector<32x128xbf16>
    %c0_19 = arith.constant 0 : index
    %c0_20 = arith.constant 0 : index
    %27 = vector.load %arg8[%c0_19, %c0_20] : memref<32x128xbf16, #tpu.memory_space<vmem>>, vector<32x128xbf16>
    tpu.vector_store %arg8[%c0_19, %c0_20], %26 {strides = array<i32>} : memref<32x128xbf16, #tpu.memory_space<vmem>>, vector<32x128xbf16>,
    return
  }
  func.func @transform_0(%arg0: i32) -> (i32, i32) {
    %c0_i32 = arith.constant 0 : i32
    %c0_i32_0 = arith.constant 0 : i32
    return %arg0, %c0_i32 : i32, i32
  }
  func.func @transform_1(%arg0: i32) -> (i32, i32) {
    %c0_i32 = arith.constant 0 : i32
    %c0_i32_0 = arith.constant 0 : i32
    %c0_i32_1 = arith.constant 0 : i32
    return %c0_i32, %c0_i32_0 : i32, i32
  }
  func.func @transform_2(%arg0: i32) -> (i32, i32) {
    %c0_i32 = arith.constant 0 : i32
    %c0_i32_0 = arith.constant 0 : i32
    %c0_i32_1 = arith.constant 0 : i32
    return %c0_i32, %c0_i32_0 : i32, i32
  }
  func.func @transform_3(%arg0: i32) -> (i32, i32) {
    %c0_i32 = arith.constant 0 : i32
    %c0_i32_0 = arith.constant 0 : i32
    %c0_i32_1 = arith.constant 0 : i32
    return %c0_i32, %c0_i32_0 : i32, i32
  }
  func.func @transform_4(%arg0: i32) -> (i32, i32) {
    %c0_i32 = arith.constant 0 : i32
    %c0_i32_0 = arith.constant 0 : i32
    %c0_i32_1 = arith.constant 0 : i32
    return %c0_i32, %c0_i32_0 : i32, i32
  }
  func.func @transform_5(%arg0: i32) -> (i32, i32) {
    %c0_i32 = arith.constant 0 : i32
    %c0_i32_0 = arith.constant 0 : i32
    %c0_i32_1 = arith.constant 0 : i32
    return %c0_i32, %c0_i32_0 : i32, i32
  }
  func.func @transform_6(%arg0: i32) -> (i32, i32) {
    %c0_i32 = arith.constant 0 : i32
    %c0_i32_0 = arith.constant 0 : i32
    %c0_i32_1 = arith.constant 0 : i32
    return %c0_i32, %c0_i32_0 : i32, i32
  }
  func.func @transform_7(%arg0: i32) -> (i32, i32) {
    %c0_i32 = arith.constant 0 : i32
    %c0_i32_0 = arith.constant 0 : i32
    return %arg0, %c0_i32 : i32, i32
  }
}

</mosaic_0001>

<llo_original>
// kernel: tpu_custom_call.1
$region0: #{tpu_custom_call.1}
  #allocation0 [shape = 'u32[]', space=smem, size = 0x4, offset = 0x4, fixed_abs, tag = 'smem constant byte address 0x4 - core index']
  #allocation1 [shape = 'u32[72,128]{1,0:T(1,128)}', space=vmem, size = 0x9000, scoped, tag = 'internal scratch']
  %s0 = inlined_call_operand.vmem [shape: bf16[4096,3], index: 0, kind: input, shape index: {}]
  %s1 = inlined_call_operand.vmem [shape: bf16[3,64], index: 1, kind: input, shape index: {}]
  %s2 = inlined_call_operand.vmem [shape: f32[1,64], index: 2, kind: input, shape index: {}]
  %s3 = inlined_call_operand.vmem [shape: bf16[64,64], index: 3, kind: input, shape index: {}]
  %s4 = inlined_call_operand.vmem [shape: f32[1,64], index: 4, kind: input, shape index: {}]
  %s5 = inlined_call_operand.vmem [shape: bf16[64,128], index: 5, kind: input, shape index: {}]
  %s6 = inlined_call_operand.vmem [shape: f32[1,128], index: 6, kind: input, shape index: {}]
  %s7 = inlined_call_operand.hbm [shape: bf16[128,128], index: 7, kind: output, shape index: {}]
  %s8 = sld [smem:[#allocation0]]
  $region61: #{tpu_custom_call.1} parent=0
    _
  %s10 = ssub.s32 1, %s8
  %s11 = scalar_select 0, %s10, %s8
  $region1: #{tpu_custom_call.1} parent=0
    #allocation2 [shape = 'u8[16384]{0}', space=vmem, size = 0x4000, scoped, tag = 'output window, operand 0']
    #allocation3 [shape = 's32[2]{0}', space=sflag, size = 0x8, scoped, tag = 'scoped memory for tpu_custom_call.1']
    %12 = vsyncpa [#allocation3], 0
    %s13 = scalar_lea.sflag [#allocation3], 1
    %14 = vsyncpa %s13, 0
    loop: start=0, step=1, limit=6
    $region2: #{tpu_custom_call.1} parent=1 // loop_pre_header
      _
    $region3: #{tpu_custom_call.1} parent=1 // loop_header
      %s16 = sphi 0, %s20
      %p17 = scmp.ge.s32.totalorder %s16, 6
      %s26 = sphi 0, %s28
      %s29 = sphi 0, %s26
      %s30 = sphi 0, %s29
      %s46 = sphi 0, %s30
      %s50 = sphi 0, %s50
      %s52 = sphi 0, %s50
      %s53 = sphi 0, %s52
      %s67 = sphi 0, %s53
      %s71 = sphi 0, %s71
      %s73 = sphi 0, %s71
      %s74 = sphi 0, %s73
      %s88 = sphi 0, %s74
      %s92 = sphi 0, %s92
      %s94 = sphi 0, %s92
      %s95 = sphi 0, %s94
      %s109 = sphi 0, %s95
      %s113 = sphi 0, %s113
      %s115 = sphi 0, %s113
      %s116 = sphi 0, %s115
      %s130 = sphi 0, %s116
      %s134 = sphi 0, %s134
      %s136 = sphi 0, %s134
      %s137 = sphi 0, %s136
      %s151 = sphi 0, %s137
      %s155 = sphi 0, %s155
      %s157 = sphi 0, %s155
      %s158 = sphi 0, %s157
      %s172 = sphi 0, %s158
      %s178 = sphi 0, %s180
      %s181 = sphi 0, %s178
      %s182 = sphi 0, %s181
      %s198 = sphi 0, %s182
    $region4: #{tpu_custom_call.1} parent=1 // loop_header_branch
      %19 = sbr.rel (%p17) target = $region8
    $region5: #{tpu_custom_call.1} parent=1 // loop_body
      %s21 = ssub.s32 %s16, 1
      %s22 = ssub.s32 %s16, 2
      %s23 = sadd.s32 %s16, 1
      %s24 = ssub.s32 %s16, %s23
      %p25 = scmp.eq.s32.totalorder %s24, 0
      %s27 = sadd.s32 %s26, 1
      %s28 = scalar_select %p25, %s26, %s27
      %p31 = pneg %p25
      %p32 = scmp.eq.s32.totalorder %s16, 3
      %p33 = por %p31, %p32
      %p34 = scmp.ne.s32.totalorder %s26, %s29
      %p35 = scmp.eq.s32.totalorder %s16, 0
      %p36 = por %p34, %p35
      %p37 = scmp.ne.s32.totalorder %s26, %s29
      %p38 = scmp.eq.s32.totalorder %s21, 3
      %p39 = por %p37, %p38
      %p40 = scmp.ne.s32.totalorder %s29, %s30
      %p41 = scmp.eq.s32.totalorder %s21, 0
      %p42 = por %p40, %p41
      %p43 = scmp.ne.s32.totalorder %s29, %s30
      %p44 = scmp.eq.s32.totalorder %s22, 3
      %p45 = por %p43, %p44
      %p47 = scmp.ne.s32.totalorder %s30, %s46
      %p48 = scmp.eq.s32.totalorder %s22, 0
      %p49 = por %p47, %p48
      %s51 = sadd.s32 %s50, 1
      %p54 = scmp.eq.s32.totalorder %s16, 3
      %p55 = scmp.ne.s32.totalorder %s50, %s52
      %p56 = scmp.eq.s32.totalorder %s16, 0
      %p57 = por %p55, %p56
      %p58 = scmp.ne.s32.totalorder %s50, %s52
      %p59 = scmp.eq.s32.totalorder %s21, 3
      %p60 = por %p58, %p59
      %p61 = scmp.ne.s32.totalorder %s52, %s53
      %p62 = scmp.eq.s32.totalorder %s21, 0
      %p63 = por %p61, %p62
      %p64 = scmp.ne.s32.totalorder %s52, %s53
      %p65 = scmp.eq.s32.totalorder %s22, 3
      %p66 = por %p64, %p65
      %p68 = scmp.ne.s32.totalorder %s53, %s67
      %p69 = scmp.eq.s32.totalorder %s22, 0
      %p70 = por %p68, %p69
      %s72 = sadd.s32 %s71, 1
      %p75 = scmp.eq.s32.totalorder %s16, 3
      %p76 = scmp.ne.s32.totalorder %s71, %s73
      %p77 = scmp.eq.s32.totalorder %s16, 0
      %p78 = por %p76, %p77
      %p79 = scmp.ne.s32.totalorder %s71, %s73
      %p80 = scmp.eq.s32.totalorder %s21, 3
      %p81 = por %p79, %p80
      %p82 = scmp.ne.s32.totalorder %s73, %s74
      %p83 = scmp.eq.s32.totalorder %s21, 0
      %p84 = por %p82, %p83
      %p85 = scmp.ne.s32.totalorder %s73, %s74
      %p86 = scmp.eq.s32.totalorder %s22, 3
      %p87 = por %p85, %p86
      %p89 = scmp.ne.s32.totalorder %s74, %s88
      %p90 = scmp.eq.s32.totalorder %s22, 0
      %p91 = por %p89, %p90
      %s93 = sadd.s32 %s92, 1
      %p96 = scmp.eq.s32.totalorder %s16, 3
      %p97 = scmp.ne.s32.totalorder %s92, %s94
      %p98 = scmp.eq.s32.totalorder %s16, 0
      %p99 = por %p97, %p98
      %p100 = scmp.ne.s32.totalorder %s92, %s94
      %p101 = scmp.eq.s32.totalorder %s21, 3
      %p102 = por %p100, %p101
      %p103 = scmp.ne.s32.totalorder %s94, %s95
      %p104 = scmp.eq.s32.totalorder %s21, 0
      %p105 = por %p103, %p104
      %p106 = scmp.ne.s32.totalorder %s94, %s95
      %p107 = scmp.eq.s32.totalorder %s22, 3
      %p108 = por %p106, %p107
      %p110 = scmp.ne.s32.totalorder %s95, %s109
      %p111 = scmp.eq.s32.totalorder %s22, 0
      %p112 = por %p110, %p111
      %s114 = sadd.s32 %s113, 1
      %p117 = scmp.eq.s32.totalorder %s16, 3
      %p118 = scmp.ne.s32.totalorder %s113, %s115
      %p119 = scmp.eq.s32.totalorder %s16, 0
      %p120 = por %p118, %p119
      %p121 = scmp.ne.s32.totalorder %s113, %s115
      %p122 = scmp.eq.s32.totalorder %s21, 3
      %p123 = por %p121, %p122
      %p124 = scmp.ne.s32.totalorder %s115, %s116
      %p125 = scmp.eq.s32.totalorder %s21, 0
      %p126 = por %p124, %p125
      %p127 = scmp.ne.s32.totalorder %s115, %s116
      %p128 = scmp.eq.s32.totalorder %s22, 3
      %p129 = por %p127, %p128
      %p131 = scmp.ne.s32.totalorder %s116, %s130
      %p132 = scmp.eq.s32.totalorder %s22, 0
      %p133 = por %p131, %p132
      %s135 = sadd.s32 %s134, 1
      %p138 = scmp.eq.s32.totalorder %s16, 3
      %p139 = scmp.ne.s32.totalorder %s134, %s136
      %p140 = scmp.eq.s32.totalorder %s16, 0
      %p141 = por %p139, %p140
      %p142 = scmp.ne.s32.totalorder %s134, %s136
      %p143 = scmp.eq.s32.totalorder %s21, 3
      %p144 = por %p142, %p143
      %p145 = scmp.ne.s32.totalorder %s136, %s137
      %p146 = scmp.eq.s32.totalorder %s21, 0
      %p147 = por %p145, %p146
      %p148 = scmp.ne.s32.totalorder %s136, %s137
      %p149 = scmp.eq.s32.totalorder %s22, 3
      %p150 = por %p148, %p149
      %p152 = scmp.ne.s32.totalorder %s137, %s151
      %p153 = scmp.eq.s32.totalorder %s22, 0
      %p154 = por %p152, %p153
      %s156 = sadd.s32 %s155, 1
      %p159 = scmp.eq.s32.totalorder %s16, 3
      %p160 = scmp.ne.s32.totalorder %s155, %s157
      %p161 = scmp.eq.s32.totalorder %s16, 0
      %p162 = por %p160, %p161
      %p163 = scmp.ne.s32.totalorder %s155, %s157
      %p164 = scmp.eq.s32.totalorder %s21, 3
      %p165 = por %p163, %p164
      %p166 = scmp.ne.s32.totalorder %s157, %s158
      %p167 = scmp.eq.s32.totalorder %s21, 0
      %p168 = por %p166, %p167
      %p169 = scmp.ne.s32.totalorder %s157, %s158
      %p170 = scmp.eq.s32.totalorder %s22, 3
      %p171 = por %p169, %p170
      %p173 = scmp.ne.s32.totalorder %s158, %s172
      %p174 = scmp.eq.s32.totalorder %s22, 0
      %p175 = por %p173, %p174
      %s176 = ssub.s32 %s16, %s23
      %p177 = scmp.eq.s32.totalorder %s176, 0
      %s179 = sadd.s32 %s178, 1
      %s180 = scalar_select %p177, %s178, %s179
      %p183 = pneg %p177
      %p184 = scmp.eq.s32.totalorder %s16, 3
      %p185 = por %p183, %p184
      %p186 = scmp.ne.s32.totalorder %s178, %s181
      %p187 = scmp.eq.s32.totalorder %s16, 0
      %p188 = por %p186, %p187
      %p189 = scmp.ne.s32.totalorder %s178, %s181
      %p190 = scmp.eq.s32.totalorder %s21, 3
      %p191 = por %p189, %p190
      %p192 = scmp.ne.s32.totalorder %s181, %s182
      %p193 = scmp.eq.s32.totalorder %s21, 0
      %p194 = por %p192, %p193
      %p195 = scmp.ne.s32.totalorder %s181, %s182
      %p196 = scmp.eq.s32.totalorder %s22, 3
      %p197 = por %p195, %p196
      %p199 = scmp.ne.s32.totalorder %s182, %s198
      %p200 = scmp.eq.s32.totalorder %s22, 0
      %p201 = por %p199, %p200
      %p202 = scmp.le.s32.totalorder 1, %s16
      %p203 = scmp.lt.s32.totalorder %s16, 5
      %p204 = pnand %p202, %p203
      %p205 = pneg %p204
      // Predicated region
      $region9: #{tpu_custom_call.1} parent=5 // pred_check
        _
      $region10: #{tpu_custom_call.1} parent=5 // pred_check_branch
        %207 = sbr.rel (%p204) target = $region12
      $region11: #{tpu_custom_call.1} parent=5 // pred_region
        %s208 = ssub.s32 %s16, 1
        // Predicated region
        $region13: #{tpu_custom_call.1} parent=11 // pred_check
          %p209 = pneg %p63
        $region14: #{tpu_custom_call.1} parent=11 // pred_check_branch
          %211 = sbr.rel (%p209) target = $region16
        $region15: #{tpu_custom_call.1} parent=11 // pred_region
          _
        $region16: #{tpu_custom_call.1} parent=11 // pred_fallthru
          _
        // Predicated region
        $region17: #{tpu_custom_call.1} parent=11 // pred_check
          %p212 = pneg %p84
        $region18: #{tpu_custom_call.1} parent=11 // pred_check_branch
          %214 = sbr.rel (%p212) target = $region20
        $region19: #{tpu_custom_call.1} parent=11 // pred_region
          _
        $region20: #{tpu_custom_call.1} parent=11 // pred_fallthru
          _
        // Predicated region
        $region21: #{tpu_custom_call.1} parent=11 // pred_check
          %p215 = pneg %p105
        $region22: #{tpu_custom_call.1} parent=11 // pred_check_branch
          %217 = sbr.rel (%p215) target = $region24
        $region23: #{tpu_custom_call.1} parent=11 // pred_region
          _
        $region24: #{tpu_custom_call.1} parent=11 // pred_fallthru
          _
        // Predicated region
        $region25: #{tpu_custom_call.1} parent=11 // pred_check
          %p218 = pneg %p126
        $region26: #{tpu_custom_call.1} parent=11 // pred_check_branch
          %220 = sbr.rel (%p218) target = $region28
        $region27: #{tpu_custom_call.1} parent=11 // pred_region
          _
        $region28: #{tpu_custom_call.1} parent=11 // pred_fallthru
          _
        // Predicated region
        $region29: #{tpu_custom_call.1} parent=11 // pred_check
          %p221 = pneg %p147
        $region30: #{tpu_custom_call.1} parent=11 // pred_check_branch
          %223 = sbr.rel (%p221) target = $region32
        $region31: #{tpu_custom_call.1} parent=11 // pred_region
          _
        $region32: #{tpu_custom_call.1} parent=11 // pred_fallthru
          _
        // Predicated region
        $region33: #{tpu_custom_call.1} parent=11 // pred_check
          %p224 = pneg %p168
        $region34: #{tpu_custom_call.1} parent=11 // pred_check_branch
          %226 = sbr.rel (%p224) target = $region36
        $region35: #{tpu_custom_call.1} parent=11 // pred_region
          _
        $region36: #{tpu_custom_call.1} parent=11 // pred_fallthru
          _
      $region12: #{tpu_custom_call.1} parent=5 // pred_fallthru
        _
      %p227 = scmp.lt.s32.totalorder %s16, 4
      // Predicated region
      $region37: #{tpu_custom_call.1} parent=5 // pred_check
        %p228 = pneg %p227
      $region38: #{tpu_custom_call.1} parent=5 // pred_check_branch
        %230 = sbr.rel (%p228) target = $region40
      $region39: #{tpu_custom_call.1} parent=5 // pred_region
        // Predicated region
        $region41: #{tpu_custom_call.1} parent=39 // pred_check
          %p231 = pneg %p36
        $region42: #{tpu_custom_call.1} parent=39 // pred_check_branch
          %233 = sbr.rel (%p231) target = $region44
        $region43: #{tpu_custom_call.1} parent=39 // pred_region
          %s234 = smul.u32 128, %s16
          %p235 = scmp.lt.s32.totalorder %s234, 511
          %s236 = scalar_select %p235, %s234, 511
          %s237 = smul.addr %s236, 4
          %s238 = scalar_lea.vmem %s0, %s237
          %s239 = smul.u32 128, %s16
        $region44: #{tpu_custom_call.1} parent=39 // pred_fallthru
          _
      $region40: #{tpu_custom_call.1} parent=5 // pred_fallthru
        _
      %p240 = scmp.le.s32.totalorder 1, %s16
      %p241 = scmp.lt.s32.totalorder %s16, 5
      %p242 = pnand %p240, %p241
      %p243 = pneg %p242
      // Predicated region
      $region45: #{tpu_custom_call.1} parent=5 // pred_check
        _
      $region46: #{tpu_custom_call.1} parent=5 // pred_check_branch
        %245 = sbr.rel (%p242) target = $region48
      $region47: #{tpu_custom_call.1} parent=5 // pred_region
        %s246 = ssub.s32 %s16, 1
        %s247 = smul.u32 128, %s21
        %p248 = scmp.lt.s32.totalorder %s247, 511
        %s249 = scalar_select %p248, %s247, 511
        %s250 = smul.addr %s249, 4
        %s251 = scalar_lea.vmem %s0, %s250
        %p252 = pneg %p42
        %p253 = pneg %p39
        %p254 = pneg %p63
        %p255 = pneg %p60
        %p256 = pneg %p84
        %p257 = pneg %p81
        %p258 = pneg %p105
        %p259 = pneg %p102
        %p260 = pneg %p126
        %p261 = pneg %p123
        %p262 = pneg %p147
        %p263 = pneg %p144
        %p264 = pneg %p168
        %p265 = pneg %p165
        %p266 = pneg %p194
        %p267 = pneg %p191
        %s268 = sand.u32 %s181, 1
        %s269 = scalar_lea.sflag [#allocation3], %s268
        %s270 = sand.u32 %s181, 1
        %s271 = smul.addr %s270, 16
        %s272 = scalar_lea.vmem [#allocation2], %s271
        %s273 = smul.u32 128, %s21
        %p274 = scmp.lt.s32.totalorder %s273, 511
        %s275 = scalar_select %p274, %s273, 511
        %s276 = smul.addr %s275, 4
        %s277 = scalar_lea.vmem %s0, %s276
        %s278 = smul.u32 128, %s21
        %s279 = smul.u32 4, %s21
        %v281 = vld [vmem:[%s277] sm:$0xf]
        %v282 = vld [vmem:[%s277 + $0x4] sm:$0xf]
        %v283 = vld [vmem:[%s277 + $0x8] sm:$0xf]
        %v284 = vld [vmem:[%s277 + $0xc] sm:$0xf]
        %v285 = vld [vmem:[%s277 + $0x10] sm:$0xf]
        %v286 = vld [vmem:[%s277 + $0x14] sm:$0xf]
        %v287 = vld [vmem:[%s277 + $0x18] sm:$0xf]
        %v288 = vld [vmem:[%s277 + $0x1c] sm:$0xf]
        %v289 = vld [vmem:[%s277 + $0x20] sm:$0xf]
        %v290 = vld [vmem:[%s277 + $0x24] sm:$0xf]
        %v291 = vld [vmem:[%s277 + $0x28] sm:$0xf]
        %v292 = vld [vmem:[%s277 + $0x2c] sm:$0xf]
        %v293 = vld [vmem:[%s277 + $0x30] sm:$0xf]
        %v294 = vld [vmem:[%s277 + $0x34] sm:$0xf]
        %v295 = vld [vmem:[%s277 + $0x38] sm:$0xf]
        %v296 = vld [vmem:[%s277 + $0x3c] sm:$0xf]
        %v297 = vld [vmem:[%s277 + $0x40] sm:$0xf]
        %v298 = vld [vmem:[%s277 + $0x44] sm:$0xf]
        %v299 = vld [vmem:[%s277 + $0x48] sm:$0xf]
        %v300 = vld [vmem:[%s277 + $0x4c] sm:$0xf]
        %v301 = vld [vmem:[%s277 + $0x50] sm:$0xf]
        %v302 = vld [vmem:[%s277 + $0x54] sm:$0xf]
        %v303 = vld [vmem:[%s277 + $0x58] sm:$0xf]
        %v304 = vld [vmem:[%s277 + $0x5c] sm:$0xf]
        %v305 = vld [vmem:[%s277 + $0x60] sm:$0xf]
        %v306 = vld [vmem:[%s277 + $0x64] sm:$0xf]
        %v307 = vld [vmem:[%s277 + $0x68] sm:$0xf]
        %v308 = vld [vmem:[%s277 + $0x6c] sm:$0xf]
        %v309 = vld [vmem:[%s277 + $0x70] sm:$0xf]
        %v310 = vld [vmem:[%s277 + $0x74] sm:$0xf]
        %v311 = vld [vmem:[%s277 + $0x78] sm:$0xf]
        %v312 = vld [vmem:[%s277 + $0x7c] sm:$0xf]
        %v313 = vld [vmem:[%s277 + $0x80] sm:$0xf]
        %v314 = vld [vmem:[%s277 + $0x84] sm:$0xf]
        %v315 = vld [vmem:[%s277 + $0x88] sm:$0xf]
        %v316 = vld [vmem:[%s277 + $0x8c] sm:$0xf]
        %v317 = vld [vmem:[%s277 + $0x90] sm:$0xf]
        %v318 = vld [vmem:[%s277 + $0x94] sm:$0xf]
        %v319 = vld [vmem:[%s277 + $0x98] sm:$0xf]
        %v320 = vld [vmem:[%s277 + $0x9c] sm:$0xf]
        %v321 = vld [vmem:[%s277 + $0xa0] sm:$0xf]
        %v322 = vld [vmem:[%s277 + $0xa4] sm:$0xf]
        %v323 = vld [vmem:[%s277 + $0xa8] sm:$0xf]
        %v324 = vld [vmem:[%s277 + $0xac] sm:$0xf]
        %v325 = vld [vmem:[%s277 + $0xb0] sm:$0xf]
        %v326 = vld [vmem:[%s277 + $0xb4] sm:$0xf]
        %v327 = vld [vmem:[%s277 + $0xb8] sm:$0xf]
        %v328 = vld [vmem:[%s277 + $0xbc] sm:$0xf]
        %v329 = vld [vmem:[%s277 + $0xc0] sm:$0xf]
        %v330 = vld [vmem:[%s277 + $0xc4] sm:$0xf]
        %v331 = vld [vmem:[%s277 + $0xc8] sm:$0xf]
        %v332 = vld [vmem:[%s277 + $0xcc] sm:$0xf]
        %v333 = vld [vmem:[%s277 + $0xd0] sm:$0xf]
        %v334 = vld [vmem:[%s277 + $0xd4] sm:$0xf]
        %v335 = vld [vmem:[%s277 + $0xd8] sm:$0xf]
        %v336 = vld [vmem:[%s277 + $0xdc] sm:$0xf]
        %v337 = vld [vmem:[%s277 + $0xe0] sm:$0xf]
        %v338 = vld [vmem:[%s277 + $0xe4] sm:$0xf]
        %v339 = vld [vmem:[%s277 + $0xe8] sm:$0xf]
        %v340 = vld [vmem:[%s277 + $0xec] sm:$0xf]
        %v341 = vld [vmem:[%s277 + $0xf0] sm:$0xf]
        %v342 = vld [vmem:[%s277 + $0xf4] sm:$0xf]
        %v343 = vld [vmem:[%s277 + $0xf8] sm:$0xf]
        %v344 = vld [vmem:[%s277 + $0xfc] sm:$0xf]
        %v345 = vld [vmem:[%s277 + $0x100] sm:$0xf]
        %v346 = vld [vmem:[%s277 + $0x104] sm:$0xf]
        %v347 = vld [vmem:[%s277 + $0x108] sm:$0xf]
        %v348 = vld [vmem:[%s277 + $0x10c] sm:$0xf]
        %v349 = vld [vmem:[%s277 + $0x110] sm:$0xf]
        %v350 = vld [vmem:[%s277 + $0x114] sm:$0xf]
        %v351 = vld [vmem:[%s277 + $0x118] sm:$0xf]
        %v352 = vld [vmem:[%s277 + $0x11c] sm:$0xf]
        %v353 = vld [vmem:[%s277 + $0x120] sm:$0xf]
        %v354 = vld [vmem:[%s277 + $0x124] sm:$0xf]
        %v355 = vld [vmem:[%s277 + $0x128] sm:$0xf]
        %v356 = vld [vmem:[%s277 + $0x12c] sm:$0xf]
        %v357 = vld [vmem:[%s277 + $0x130] sm:$0xf]
        %v358 = vld [vmem:[%s277 + $0x134] sm:$0xf]
        %v359 = vld [vmem:[%s277 + $0x138] sm:$0xf]
        %v360 = vld [vmem:[%s277 + $0x13c] sm:$0xf]
        %v361 = vld [vmem:[%s277 + $0x140] sm:$0xf]
        %v362 = vld [vmem:[%s277 + $0x144] sm:$0xf]
        %v363 = vld [vmem:[%s277 + $0x148] sm:$0xf]
        %v364 = vld [vmem:[%s277 + $0x14c] sm:$0xf]
        %v365 = vld [vmem:[%s277 + $0x150] sm:$0xf]
        %v366 = vld [vmem:[%s277 + $0x154] sm:$0xf]
        %v367 = vld [vmem:[%s277 + $0x158] sm:$0xf]
        %v368 = vld [vmem:[%s277 + $0x15c] sm:$0xf]
        %v369 = vld [vmem:[%s277 + $0x160] sm:$0xf]
        %v370 = vld [vmem:[%s277 + $0x164] sm:$0xf]
        %v371 = vld [vmem:[%s277 + $0x168] sm:$0xf]
        %v372 = vld [vmem:[%s277 + $0x16c] sm:$0xf]
        %v373 = vld [vmem:[%s277 + $0x170] sm:$0xf]
        %v374 = vld [vmem:[%s277 + $0x174] sm:$0xf]
        %v375 = vld [vmem:[%s277 + $0x178] sm:$0xf]
        %v376 = vld [vmem:[%s277 + $0x17c] sm:$0xf]
        %v377 = vld [vmem:[%s277 + $0x180] sm:$0xf]
        %v378 = vld [vmem:[%s277 + $0x184] sm:$0xf]
        %v379 = vld [vmem:[%s277 + $0x188] sm:$0xf]
        %v380 = vld [vmem:[%s277 + $0x18c] sm:$0xf]
        %v381 = vld [vmem:[%s277 + $0x190] sm:$0xf]
        %v382 = vld [vmem:[%s277 + $0x194] sm:$0xf]
        %v383 = vld [vmem:[%s277 + $0x198] sm:$0xf]
        %v384 = vld [vmem:[%s277 + $0x19c] sm:$0xf]
        %v385 = vld [vmem:[%s277 + $0x1a0] sm:$0xf]
        %v386 = vld [vmem:[%s277 + $0x1a4] sm:$0xf]
        %v387 = vld [vmem:[%s277 + $0x1a8] sm:$0xf]
        %v388 = vld [vmem:[%s277 + $0x1ac] sm:$0xf]
        %v389 = vld [vmem:[%s277 + $0x1b0] sm:$0xf]
        %v390 = vld [vmem:[%s277 + $0x1b4] sm:$0xf]
        %v391 = vld [vmem:[%s277 + $0x1b8] sm:$0xf]
        %v392 = vld [vmem:[%s277 + $0x1bc] sm:$0xf]
        %v393 = vld [vmem:[%s277 + $0x1c0] sm:$0xf]
        %v394 = vld [vmem:[%s277 + $0x1c4] sm:$0xf]
        %v395 = vld [vmem:[%s277 + $0x1c8] sm:$0xf]
        %v396 = vld [vmem:[%s277 + $0x1cc] sm:$0xf]
        %v397 = vld [vmem:[%s277 + $0x1d0] sm:$0xf]
        %v398 = vld [vmem:[%s277 + $0x1d4] sm:$0xf]
        %v399 = vld [vmem:[%s277 + $0x1d8] sm:$0xf]
        %v400 = vld [vmem:[%s277 + $0x1dc] sm:$0xf]
        %v401 = vld [vmem:[%s277 + $0x1e0] sm:$0xf]
        %v402 = vld [vmem:[%s277 + $0x1e4] sm:$0xf]
        %v403 = vld [vmem:[%s277 + $0x1e8] sm:$0xf]
        %v404 = vld [vmem:[%s277 + $0x1ec] sm:$0xf]
        %v405 = vld [vmem:[%s277 + $0x1f0] sm:$0xf]
        %v406 = vld [vmem:[%s277 + $0x1f4] sm:$0xf]
        %v407 = vld [vmem:[%s277 + $0x1f8] sm:$0xf]
        %v408 = vld [vmem:[%s277 + $0x1fc] sm:$0xf]
        %v409 = vld [vmem:[%s1] sm:$0x3]
        %v410 = vld [vmem:[%s2] sm:$0x1]
        %v412 = vperm.slane %v410, 0
        %v542 = vunpack.c.l.b16 %v281
        %v543 = vunpack.c.l.b16 %v282
        %v544 = vunpack.c.l.b16 %v283
        %v545 = vunpack.c.l.b16 %v284
        %v546 = vunpack.c.l.b16 %v285
        %v547 = vunpack.c.l.b16 %v286
        %v548 = vunpack.c.l.b16 %v287
        %v549 = vunpack.c.l.b16 %v288
        %v550 = vunpack.c.l.b16 %v289
        %v551 = vunpack.c.l.b16 %v290
        %v552 = vunpack.c.l.b16 %v291
        %v553 = vunpack.c.l.b16 %v292
        %v554 = vunpack.c.l.b16 %v293
        %v555 = vunpack.c.l.b16 %v294
        %v556 = vunpack.c.l.b16 %v295
        %v557 = vunpack.c.l.b16 %v296
        %v558 = vunpack.c.l.b16 %v297
        %v559 = vunpack.c.l.b16 %v298
        %v560 = vunpack.c.l.b16 %v299
        %v561 = vunpack.c.l.b16 %v300
        %v562 = vunpack.c.l.b16 %v301
        %v563 = vunpack.c.l.b16 %v302
        %v564 = vunpack.c.l.b16 %v303
        %v565 = vunpack.c.l.b16 %v304
        %v566 = vunpack.c.l.b16 %v305
        %v567 = vunpack.c.l.b16 %v306
        %v568 = vunpack.c.l.b16 %v307
        %v569 = vunpack.c.l.b16 %v308
        %v570 = vunpack.c.l.b16 %v309
        %v571 = vunpack.c.l.b16 %v310
        %v572 = vunpack.c.l.b16 %v311
        %v573 = vunpack.c.l.b16 %v312
        %v574 = vunpack.c.l.b16 %v313
        %v575 = vunpack.c.l.b16 %v314
        %v576 = vunpack.c.l.b16 %v315
        %v577 = vunpack.c.l.b16 %v316
        %v578 = vunpack.c.l.b16 %v317
        %v579 = vunpack.c.l.b16 %v318
        %v580 = vunpack.c.l.b16 %v319
        %v581 = vunpack.c.l.b16 %v320
        %v582 = vunpack.c.l.b16 %v321
        %v583 = vunpack.c.l.b16 %v322
        %v584 = vunpack.c.l.b16 %v323
        %v585 = vunpack.c.l.b16 %v324
        %v586 = vunpack.c.l.b16 %v325
        %v587 = vunpack.c.l.b16 %v326
        %v588 = vunpack.c.l.b16 %v327
        %v589 = vunpack.c.l.b16 %v328
        %v590 = vunpack.c.l.b16 %v329
        %v591 = vunpack.c.l.b16 %v330
        %v592 = vunpack.c.l.b16 %v331
        %v593 = vunpack.c.l.b16 %v332
        %v594 = vunpack.c.l.b16 %v333
        %v595 = vunpack.c.l.b16 %v334
        %v596 = vunpack.c.l.b16 %v335
        %v597 = vunpack.c.l.b16 %v336
        %v598 = vunpack.c.l.b16 %v337
        %v599 = vunpack.c.l.b16 %v338
        %v600 = vunpack.c.l.b16 %v339
        %v601 = vunpack.c.l.b16 %v340
        %v602 = vunpack.c.l.b16 %v341
        %v603 = vunpack.c.l.b16 %v342
        %v604 = vunpack.c.l.b16 %v343
        %v605 = vunpack.c.l.b16 %v344
        %v606 = vunpack.c.l.b16 %v345
        %v607 = vunpack.c.l.b16 %v346
        %v608 = vunpack.c.l.b16 %v347
        %v609 = vunpack.c.l.b16 %v348
        %v610 = vunpack.c.l.b16 %v349
        %v611 = vunpack.c.l.b16 %v350
        %v612 = vunpack.c.l.b16 %v351
        %v613 = vunpack.c.l.b16 %v352
        %v614 = vunpack.c.l.b16 %v353
        %v615 = vunpack.c.l.b16 %v354
        %v616 = vunpack.c.l.b16 %v355
        %v617 = vunpack.c.l.b16 %v356
        %v618 = vunpack.c.l.b16 %v357
        %v619 = vunpack.c.l.b16 %v358
        %v620 = vunpack.c.l.b16 %v359
        %v621 = vunpack.c.l.b16 %v360
        %v622 = vunpack.c.l.b16 %v361
        %v623 = vunpack.c.l.b16 %v362
        %v624 = vunpack.c.l.b16 %v363
        %v625 = vunpack.c.l.b16 %v364
        %v626 = vunpack.c.l.b16 %v365
        %v627 = vunpack.c.l.b16 %v366
        %v628 = vunpack.c.l.b16 %v367
        %v629 = vunpack.c.l.b16 %v368
        %v630 = vunpack.c.l.b16 %v369
        %v631 = vunpack.c.l.b16 %v370
        %v632 = vunpack.c.l.b16 %v371
        %v633 = vunpack.c.l.b16 %v372
        %v634 = vunpack.c.l.b16 %v373
        %v635 = vunpack.c.l.b16 %v374
        %v636 = vunpack.c.l.b16 %v375
        %v637 = vunpack.c.l.b16 %v376
        %v638 = vunpack.c.l.b16 %v377
        %v639 = vunpack.c.l.b16 %v378
        %v640 = vunpack.c.l.b16 %v379
        %v641 = vunpack.c.l.b16 %v380
        %v642 = vunpack.c.l.b16 %v381
        %v643 = vunpack.c.l.b16 %v382
        %v644 = vunpack.c.l.b16 %v383
        %v645 = vunpack.c.l.b16 %v384
        %v646 = vunpack.c.l.b16 %v385
        %v647 = vunpack.c.l.b16 %v386
        %v648 = vunpack.c.l.b16 %v387
        %v649 = vunpack.c.l.b16 %v388
        %v650 = vunpack.c.l.b16 %v389
        %v651 = vunpack.c.l.b16 %v390
        %v652 = vunpack.c.l.b16 %v391
        %v653 = vunpack.c.l.b16 %v392
        %v654 = vunpack.c.l.b16 %v393
        %v655 = vunpack.c.l.b16 %v394
        %v656 = vunpack.c.l.b16 %v395
        %v657 = vunpack.c.l.b16 %v396
        %v658 = vunpack.c.l.b16 %v397
        %v659 = vunpack.c.l.b16 %v398
        %v660 = vunpack.c.l.b16 %v399
        %v661 = vunpack.c.l.b16 %v400
        %v662 = vunpack.c.l.b16 %v401
        %v663 = vunpack.c.l.b16 %v402
        %v664 = vunpack.c.l.b16 %v403
        %v665 = vunpack.c.l.b16 %v404
        %v666 = vunpack.c.l.b16 %v405
        %v667 = vunpack.c.l.b16 %v406
        %v668 = vunpack.c.l.b16 %v407
        %v669 = vunpack.c.l.b16 %v408
        %v670 = vpack.c.b16 %v543, %v542
        %v671 = vpack.c.b16 %v545, %v544
        %v672 = vpack.c.b16 %v547, %v546
        %v673 = vpack.c.b16 %v549, %v548
        %v674 = vpack.c.b16 %v551, %v550
        %v675 = vpack.c.b16 %v553, %v552
        %v676 = vpack.c.b16 %v555, %v554
        %v677 = vpack.c.b16 %v557, %v556
        %v678 = vpack.c.b16 %v559, %v558
        %v679 = vpack.c.b16 %v561, %v560
        %v680 = vpack.c.b16 %v563, %v562
        %v681 = vpack.c.b16 %v565, %v564
        %v682 = vpack.c.b16 %v567, %v566
        %v683 = vpack.c.b16 %v569, %v568
        %v684 = vpack.c.b16 %v571, %v570
        %v685 = vpack.c.b16 %v573, %v572
        %v686 = vpack.c.b16 %v575, %v574
        %v687 = vpack.c.b16 %v577, %v576
        %v688 = vpack.c.b16 %v579, %v578
        %v689 = vpack.c.b16 %v581, %v580
        %v690 = vpack.c.b16 %v583, %v582
        %v691 = vpack.c.b16 %v585, %v584
        %v692 = vpack.c.b16 %v587, %v586
        %v693 = vpack.c.b16 %v589, %v588
        %v694 = vpack.c.b16 %v591, %v590
        %v695 = vpack.c.b16 %v593, %v592
        %v696 = vpack.c.b16 %v595, %v594
        %v697 = vpack.c.b16 %v597, %v596
        %v698 = vpack.c.b16 %v599, %v598
        %v699 = vpack.c.b16 %v601, %v600
        %v700 = vpack.c.b16 %v603, %v602
        %v701 = vpack.c.b16 %v605, %v604
        %v702 = vpack.c.b16 %v607, %v606
        %v703 = vpack.c.b16 %v609, %v608
        %v704 = vpack.c.b16 %v611, %v610
        %v705 = vpack.c.b16 %v613, %v612
        %v706 = vpack.c.b16 %v615, %v614
        %v707 = vpack.c.b16 %v617, %v616
        %v708 = vpack.c.b16 %v619, %v618
        %v709 = vpack.c.b16 %v621, %v620
        %v710 = vpack.c.b16 %v623, %v622
        %v711 = vpack.c.b16 %v625, %v624
        %v712 = vpack.c.b16 %v627, %v626
        %v713 = vpack.c.b16 %v629, %v628
        %v714 = vpack.c.b16 %v631, %v630
        %v715 = vpack.c.b16 %v633, %v632
        %v716 = vpack.c.b16 %v635, %v634
        %v717 = vpack.c.b16 %v637, %v636
        %v718 = vpack.c.b16 %v639, %v638
        %v719 = vpack.c.b16 %v641, %v640
        %v720 = vpack.c.b16 %v643, %v642
        %v721 = vpack.c.b16 %v645, %v644
        %v722 = vpack.c.b16 %v647, %v646
        %v723 = vpack.c.b16 %v649, %v648
        %v724 = vpack.c.b16 %v651, %v650
        %v725 = vpack.c.b16 %v653, %v652
        %v726 = vpack.c.b16 %v655, %v654
        %v727 = vpack.c.b16 %v657, %v656
        %v728 = vpack.c.b16 %v659, %v658
        %v729 = vpack.c.b16 %v661, %v660
        %v730 = vpack.c.b16 %v663, %v662
        %v731 = vpack.c.b16 %v665, %v664
        %v732 = vpack.c.b16 %v667, %v666
        %v733 = vpack.c.b16 %v669, %v668
        %vm734 = vcmask 23552
        %v736 = vsel %vm734, %v670, 0
        %v739 = vsel %vm734, %v671, 0
        %v742 = vsel %vm734, %v672, 0
        %v745 = vsel %vm734, %v673, 0
        %v748 = vsel %vm734, %v674, 0
        %v751 = vsel %vm734, %v675, 0
        %v754 = vsel %vm734, %v676, 0
        %v757 = vsel %vm734, %v677, 0
        %v760 = vsel %vm734, %v678, 0
        %v763 = vsel %vm734, %v679, 0
        %v766 = vsel %vm734, %v680, 0
        %v769 = vsel %vm734, %v681, 0
        %v772 = vsel %vm734, %v682, 0
        %v775 = vsel %vm734, %v683, 0
        %v778 = vsel %vm734, %v684, 0
        %v781 = vsel %vm734, %v685, 0
        %v784 = vsel %vm734, %v686, 0
        %v787 = vsel %vm734, %v687, 0
        %v790 = vsel %vm734, %v688, 0
        %v793 = vsel %vm734, %v689, 0
        %v796 = vsel %vm734, %v690, 0
        %v799 = vsel %vm734, %v691, 0
        %v802 = vsel %vm734, %v692, 0
        %v805 = vsel %vm734, %v693, 0
        %v808 = vsel %vm734, %v694, 0
        %v811 = vsel %vm734, %v695, 0
        %v814 = vsel %vm734, %v696, 0
        %v817 = vsel %vm734, %v697, 0
        %v820 = vsel %vm734, %v698, 0
        %v823 = vsel %vm734, %v699, 0
        %v826 = vsel %vm734, %v700, 0
        %v829 = vsel %vm734, %v701, 0
        %v832 = vsel %vm734, %v702, 0
        %v835 = vsel %vm734, %v703, 0
        %v838 = vsel %vm734, %v704, 0
        %v841 = vsel %vm734, %v705, 0
        %v844 = vsel %vm734, %v706, 0
        %v847 = vsel %vm734, %v707, 0
        %v850 = vsel %vm734, %v708, 0
        %v853 = vsel %vm734, %v709, 0
        %v856 = vsel %vm734, %v710, 0
        %v859 = vsel %vm734, %v711, 0
        %v862 = vsel %vm734, %v712, 0
        %v865 = vsel %vm734, %v713, 0
        %v868 = vsel %vm734, %v714, 0
        %v871 = vsel %vm734, %v715, 0
        %v874 = vsel %vm734, %v716, 0
        %v877 = vsel %vm734, %v717, 0
        %v880 = vsel %vm734, %v718, 0
        %v883 = vsel %vm734, %v719, 0
        %v886 = vsel %vm734, %v720, 0
        %v889 = vsel %vm734, %v721, 0
        %v892 = vsel %vm734, %v722, 0
        %v895 = vsel %vm734, %v723, 0
        %v898 = vsel %vm734, %v724, 0
        %v901 = vsel %vm734, %v725, 0
        %v904 = vsel %vm734, %v726, 0
        %v907 = vsel %vm734, %v727, 0
        %v910 = vsel %vm734, %v728, 0
        %v913 = vsel %vm734, %v729, 0
        %v916 = vsel %vm734, %v730, 0
        %v919 = vsel %vm734, %v731, 0
        %v922 = vsel %vm734, %v732, 0
        %v925 = vsel %vm734, %v733, 0
        %vm927 = vcmask 1040384
        %vm928 = vcmask 1041408
        %v929 = vsel %vm927, 4294967295, 65535
        %v930 = vsel %vm928, %v929, 0
        %v932 = vand.u32 %v409, %v930
        %934 = vmatpush.bf16.msra.mxu0 0
        %935 = vmatpush.bf16.msra.mxu0 0
        %936 = vmatpush.bf16.msra.mxu0 0
        %937 = vmatpush.bf16.msra.mxu0 0
        %938 = vmatpush.bf16.msra.mxu0 0
        %939 = vmatpush.bf16.msra.mxu0 0
        %940 = vmatpush.bf16.msra.mxu0 0
        %941 = vmatpush.bf16.msra.mxu0 %v932
        %942 = vmatmul.bf16.gmra.mxu0 %v736
        %v943 = vpop.f32.mrf.mxu0
        %v944 = vadd.f32 %v412, %v943
        %v945 = vpop.f32.mrf.mxu0
        %v946 = vadd.f32 %v412, %v945
        %947 = vmatmul.bf16.gmra.mxu0 %v739
        %v948 = vpop.f32.mrf.mxu0
        %v949 = vadd.f32 %v412, %v948
        %v950 = vpop.f32.mrf.mxu0
        %v951 = vadd.f32 %v412, %v950
        %952 = vmatmul.bf16.gmra.mxu0 %v742
        %v953 = vpop.f32.mrf.mxu0
        %v954 = vadd.f32 %v412, %v953
        %v955 = vpop.f32.mrf.mxu0
        %v956 = vadd.f32 %v412, %v955
        %957 = vmatmul.bf16.gmra.mxu0 %v745
        %v958 = vpop.f32.mrf.mxu0
        %v959 = vadd.f32 %v412, %v958
        %v960 = vpop.f32.mrf.mxu0
        %v961 = vadd.f32 %v412, %v960
        %962 = vmatmul.bf16.gmra.mxu0 %v748
        %v963 = vpop.f32.mrf.mxu0
        %v964 = vadd.f32 %v412, %v963
        %v965 = vpop.f32.mrf.mxu0
        %v966 = vadd.f32 %v412, %v965
        %967 = vmatmul.bf16.gmra.mxu0 %v751
        %v968 = vpop.f32.mrf.mxu0
        %v969 = vadd.f32 %v412, %v968
        %v970 = vpop.f32.mrf.mxu0
        %v971 = vadd.f32 %v412, %v970
        %972 = vmatmul.bf16.gmra.mxu0 %v754
        %v973 = vpop.f32.mrf.mxu0
        %v974 = vadd.f32 %v412, %v973
        %v975 = vpop.f32.mrf.mxu0
        %v976 = vadd.f32 %v412, %v975
        %977 = vmatmul.bf16.gmra.mxu0 %v757
        %v978 = vpop.f32.mrf.mxu0
        %v979 = vadd.f32 %v412, %v978
        %v980 = vpop.f32.mrf.mxu0
        %v981 = vadd.f32 %v412, %v980
        %982 = vmatmul.bf16.gmra.mxu0 %v760
        %v983 = vpop.f32.mrf.mxu0
        %v984 = vadd.f32 %v412, %v983
        %v985 = vpop.f32.mrf.mxu0
        %v986 = vadd.f32 %v412, %v985
        %987 = vmatmul.bf16.gmra.mxu0 %v763
        %v988 = vpop.f32.mrf.mxu0
        %v989 = vadd.f32 %v412, %v988
        %v990 = vpop.f32.mrf.mxu0
        %v991 = vadd.f32 %v412, %v990
        %992 = vmatmul.bf16.gmra.mxu0 %v766
        %v993 = vpop.f32.mrf.mxu0
        %v994 = vadd.f32 %v412, %v993
        %v995 = vpop.f32.mrf.mxu0
        %v996 = vadd.f32 %v412, %v995
        %997 = vmatmul.bf16.gmra.mxu0 %v769
        %v998 = vpop.f32.mrf.mxu0
        %v999 = vadd.f32 %v412, %v998
        %v1000 = vpop.f32.mrf.mxu0
        %v1001 = vadd.f32 %v412, %v1000
        %1002 = vmatmul.bf16.gmra.mxu0 %v772
        %v1003 = vpop.f32.mrf.mxu0
        %v1004 = vadd.f32 %v412, %v1003
        %v1005 = vpop.f32.mrf.mxu0
        %v1006 = vadd.f32 %v412, %v1005
        %1007 = vmatmul.bf16.gmra.mxu0 %v775
        %v1008 = vpop.f32.mrf.mxu0
        %v1009 = vadd.f32 %v412, %v1008
        %v1010 = vpop.f32.mrf.mxu0
        %v1011 = vadd.f32 %v412, %v1010
        %1012 = vmatmul.bf16.gmra.mxu0 %v778
        %v1013 = vpop.f32.mrf.mxu0
        %v1014 = vadd.f32 %v412, %v1013
        %v1015 = vpop.f32.mrf.mxu0
        %v1016 = vadd.f32 %v412, %v1015
        %1017 = vmatmul.bf16.gmra.mxu0 %v781
        %v1018 = vpop.f32.mrf.mxu0
        %v1019 = vadd.f32 %v412, %v1018
        %v1020 = vpop.f32.mrf.mxu0
        %v1021 = vadd.f32 %v412, %v1020
        %1022 = vmatmul.bf16.gmra.mxu0 %v784
        %v1023 = vpop.f32.mrf.mxu0
        %v1024 = vadd.f32 %v412, %v1023
        %v1025 = vpop.f32.mrf.mxu0
        %v1026 = vadd.f32 %v412, %v1025
        %1027 = vmatmul.bf16.gmra.mxu0 %v787
        %v1028 = vpop.f32.mrf.mxu0
        %v1029 = vadd.f32 %v412, %v1028
        %v1030 = vpop.f32.mrf.mxu0
        %v1031 = vadd.f32 %v412, %v1030
        %1032 = vmatmul.bf16.gmra.mxu0 %v790
        %v1033 = vpop.f32.mrf.mxu0
        %v1034 = vadd.f32 %v412, %v1033
        %v1035 = vpop.f32.mrf.mxu0
        %v1036 = vadd.f32 %v412, %v1035
        %1037 = vmatmul.bf16.gmra.mxu0 %v793
        %v1038 = vpop.f32.mrf.mxu0
        %v1039 = vadd.f32 %v412, %v1038
        %v1040 = vpop.f32.mrf.mxu0
        %v1041 = vadd.f32 %v412, %v1040
        %1042 = vmatmul.bf16.gmra.mxu0 %v796
        %v1043 = vpop.f32.mrf.mxu0
        %v1044 = vadd.f32 %v412, %v1043
        %v1045 = vpop.f32.mrf.mxu0
        %v1046 = vadd.f32 %v412, %v1045
        %1047 = vmatmul.bf16.gmra.mxu0 %v799
        %v1048 = vpop.f32.mrf.mxu0
        %v1049 = vadd.f32 %v412, %v1048
        %v1050 = vpop.f32.mrf.mxu0
        %v1051 = vadd.f32 %v412, %v1050
        %1052 = vmatmul.bf16.gmra.mxu0 %v802
        %v1053 = vpop.f32.mrf.mxu0
        %v1054 = vadd.f32 %v412, %v1053
        %v1055 = vpop.f32.mrf.mxu0
        %v1056 = vadd.f32 %v412, %v1055
        %1057 = vmatmul.bf16.gmra.mxu0 %v805
        %v1058 = vpop.f32.mrf.mxu0
        %v1059 = vadd.f32 %v412, %v1058
        %v1060 = vpop.f32.mrf.mxu0
        %v1061 = vadd.f32 %v412, %v1060
        %1062 = vmatmul.bf16.gmra.mxu0 %v808
        %v1063 = vpop.f32.mrf.mxu0
        %v1064 = vadd.f32 %v412, %v1063
        %v1065 = vpop.f32.mrf.mxu0
        %v1066 = vadd.f32 %v412, %v1065
        %1067 = vmatmul.bf16.gmra.mxu0 %v811
        %v1068 = vpop.f32.mrf.mxu0
        %v1069 = vadd.f32 %v412, %v1068
        %v1070 = vpop.f32.mrf.mxu0
        %v1071 = vadd.f32 %v412, %v1070
        %1072 = vmatmul.bf16.gmra.mxu0 %v814
        %v1073 = vpop.f32.mrf.mxu0
        %v1074 = vadd.f32 %v412, %v1073
        %v1075 = vpop.f32.mrf.mxu0
        %v1076 = vadd.f32 %v412, %v1075
        %1077 = vmatmul.bf16.gmra.mxu0 %v817
        %v1078 = vpop.f32.mrf.mxu0
        %v1079 = vadd.f32 %v412, %v1078
        %v1080 = vpop.f32.mrf.mxu0
        %v1081 = vadd.f32 %v412, %v1080
        %1082 = vmatmul.bf16.gmra.mxu0 %v820
        %v1083 = vpop.f32.mrf.mxu0
        %v1084 = vadd.f32 %v412, %v1083
        %v1085 = vpop.f32.mrf.mxu0
        %v1086 = vadd.f32 %v412, %v1085
        %1087 = vmatmul.bf16.gmra.mxu0 %v823
        %v1088 = vpop.f32.mrf.mxu0
        %v1089 = vadd.f32 %v412, %v1088
        %v1090 = vpop.f32.mrf.mxu0
        %v1091 = vadd.f32 %v412, %v1090
        %1092 = vmatmul.bf16.gmra.mxu0 %v826
        %v1093 = vpop.f32.mrf.mxu0
        %v1094 = vadd.f32 %v412, %v1093
        %v1095 = vpop.f32.mrf.mxu0
        %v1096 = vadd.f32 %v412, %v1095
        %1097 = vmatmul.bf16.gmra.mxu0 %v829
        %v1098 = vpop.f32.mrf.mxu0
        %v1099 = vadd.f32 %v412, %v1098
        %v1100 = vpop.f32.mrf.mxu0
        %v1101 = vadd.f32 %v412, %v1100
        %1102 = vmatmul.bf16.gmra.mxu0 %v832
        %v1103 = vpop.f32.mrf.mxu0
        %v1104 = vadd.f32 %v412, %v1103
        %v1105 = vpop.f32.mrf.mxu0
        %v1106 = vadd.f32 %v412, %v1105
        %1107 = vmatmul.bf16.gmra.mxu0 %v835
        %v1108 = vpop.f32.mrf.mxu0
        %v1109 = vadd.f32 %v412, %v1108
        %v1110 = vpop.f32.mrf.mxu0
        %v1111 = vadd.f32 %v412, %v1110
        %1112 = vmatmul.bf16.gmra.mxu0 %v838
        %v1113 = vpop.f32.mrf.mxu0
        %v1114 = vadd.f32 %v412, %v1113
        %v1115 = vpop.f32.mrf.mxu0
        %v1116 = vadd.f32 %v412, %v1115
        %1117 = vmatmul.bf16.gmra.mxu0 %v841
        %v1118 = vpop.f32.mrf.mxu0
        %v1119 = vadd.f32 %v412, %v1118
        %v1120 = vpop.f32.mrf.mxu0
        %v1121 = vadd.f32 %v412, %v1120
        %1122 = vmatmul.bf16.gmra.mxu0 %v844
        %v1123 = vpop.f32.mrf.mxu0
        %v1124 = vadd.f32 %v412, %v1123
        %v1125 = vpop.f32.mrf.mxu0
        %v1126 = vadd.f32 %v412, %v1125
        %1127 = vmatmul.bf16.gmra.mxu0 %v847
        %v1128 = vpop.f32.mrf.mxu0
        %v1129 = vadd.f32 %v412, %v1128
        %v1130 = vpop.f32.mrf.mxu0
        %v1131 = vadd.f32 %v412, %v1130
        %1132 = vmatmul.bf16.gmra.mxu0 %v850
        %v1133 = vpop.f32.mrf.mxu0
        %v1134 = vadd.f32 %v412, %v1133
        %v1135 = vpop.f32.mrf.mxu0
        %v1136 = vadd.f32 %v412, %v1135
        %1137 = vmatmul.bf16.gmra.mxu0 %v853
        %v1138 = vpop.f32.mrf.mxu0
        %v1139 = vadd.f32 %v412, %v1138
        %v1140 = vpop.f32.mrf.mxu0
        %v1141 = vadd.f32 %v412, %v1140
        %1142 = vmatmul.bf16.gmra.mxu0 %v856
        %v1143 = vpop.f32.mrf.mxu0
        %v1144 = vadd.f32 %v412, %v1143
        %v1145 = vpop.f32.mrf.mxu0
        %v1146 = vadd.f32 %v412, %v1145
        %1147 = vmatmul.bf16.gmra.mxu0 %v859
        %v1148 = vpop.f32.mrf.mxu0
        %v1149 = vadd.f32 %v412, %v1148
        %v1150 = vpop.f32.mrf.mxu0
        %v1151 = vadd.f32 %v412, %v1150
        %1152 = vmatmul.bf16.gmra.mxu0 %v862
        %v1153 = vpop.f32.mrf.mxu0
        %v1154 = vadd.f32 %v412, %v1153
        %v1155 = vpop.f32.mrf.mxu0
        %v1156 = vadd.f32 %v412, %v1155
        %1157 = vmatmul.bf16.gmra.mxu0 %v865
        %v1158 = vpop.f32.mrf.mxu0
        %v1159 = vadd.f32 %v412, %v1158
        %v1160 = vpop.f32.mrf.mxu0
        %v1161 = vadd.f32 %v412, %v1160
        %1162 = vmatmul.bf16.gmra.mxu0 %v868
        %v1163 = vpop.f32.mrf.mxu0
        %v1164 = vadd.f32 %v412, %v1163
        %v1165 = vpop.f32.mrf.mxu0
        %v1166 = vadd.f32 %v412, %v1165
        %1167 = vmatmul.bf16.gmra.mxu0 %v871
        %v1168 = vpop.f32.mrf.mxu0
        %v1169 = vadd.f32 %v412, %v1168
        %v1170 = vpop.f32.mrf.mxu0
        %v1171 = vadd.f32 %v412, %v1170
        %1172 = vmatmul.bf16.gmra.mxu0 %v874
        %v1173 = vpop.f32.mrf.mxu0
        %v1174 = vadd.f32 %v412, %v1173
        %v1175 = vpop.f32.mrf.mxu0
        %v1176 = vadd.f32 %v412, %v1175
        %1177 = vmatmul.bf16.gmra.mxu0 %v877
        %v1178 = vpop.f32.mrf.mxu0
        %v1179 = vadd.f32 %v412, %v1178
        %v1180 = vpop.f32.mrf.mxu0
        %v1181 = vadd.f32 %v412, %v1180
        %1182 = vmatmul.bf16.gmra.mxu0 %v880
        %v1183 = vpop.f32.mrf.mxu0
        %v1184 = vadd.f32 %v412, %v1183
        %v1185 = vpop.f32.mrf.mxu0
        %v1186 = vadd.f32 %v412, %v1185
        %1187 = vmatmul.bf16.gmra.mxu0 %v883
        %v1188 = vpop.f32.mrf.mxu0
        %v1189 = vadd.f32 %v412, %v1188
        %v1190 = vpop.f32.mrf.mxu0
        %v1191 = vadd.f32 %v412, %v1190
        %1192 = vmatmul.bf16.gmra.mxu0 %v886
        %v1193 = vpop.f32.mrf.mxu0
        %v1194 = vadd.f32 %v412, %v1193
        %v1195 = vpop.f32.mrf.mxu0
        %v1196 = vadd.f32 %v412, %v1195
        %1197 = vmatmul.bf16.gmra.mxu0 %v889
        %v1198 = vpop.f32.mrf.mxu0
        %v1199 = vadd.f32 %v412, %v1198
        %v1200 = vpop.f32.mrf.mxu0
        %v1201 = vadd.f32 %v412, %v1200
        %1202 = vmatmul.bf16.gmra.mxu0 %v892
        %v1203 = vpop.f32.mrf.mxu0
        %v1204 = vadd.f32 %v412, %v1203
        %v1205 = vpop.f32.mrf.mxu0
        %v1206 = vadd.f32 %v412, %v1205
        %1207 = vmatmul.bf16.gmra.mxu0 %v895
        %v1208 = vpop.f32.mrf.mxu0
        %v1209 = vadd.f32 %v412, %v1208
        %v1210 = vpop.f32.mrf.mxu0
        %v1211 = vadd.f32 %v412, %v1210
        %1212 = vmatmul.bf16.gmra.mxu0 %v898
        %v1213 = vpop.f32.mrf.mxu0
        %v1214 = vadd.f32 %v412, %v1213
        %v1215 = vpop.f32.mrf.mxu0
        %v1216 = vadd.f32 %v412, %v1215
        %1217 = vmatmul.bf16.gmra.mxu0 %v901
        %v1218 = vpop.f32.mrf.mxu0
        %v1219 = vadd.f32 %v412, %v1218
        %v1220 = vpop.f32.mrf.mxu0
        %v1221 = vadd.f32 %v412, %v1220
        %1222 = vmatmul.bf16.gmra.mxu0 %v904
        %v1223 = vpop.f32.mrf.mxu0
        %v1224 = vadd.f32 %v412, %v1223
        %v1225 = vpop.f32.mrf.mxu0
        %v1226 = vadd.f32 %v412, %v1225
        %1227 = vmatmul.bf16.gmra.mxu0 %v907
        %v1228 = vpop.f32.mrf.mxu0
        %v1229 = vadd.f32 %v412, %v1228
        %v1230 = vpop.f32.mrf.mxu0
        %v1231 = vadd.f32 %v412, %v1230
        %1232 = vmatmul.bf16.gmra.mxu0 %v910
        %v1233 = vpop.f32.mrf.mxu0
        %v1234 = vadd.f32 %v412, %v1233
        %v1235 = vpop.f32.mrf.mxu0
        %v1236 = vadd.f32 %v412, %v1235
        %1237 = vmatmul.bf16.gmra.mxu0 %v913
        %v1238 = vpop.f32.mrf.mxu0
        %v1239 = vadd.f32 %v412, %v1238
        %v1240 = vpop.f32.mrf.mxu0
        %v1241 = vadd.f32 %v412, %v1240
        %1242 = vmatmul.bf16.gmra.mxu0 %v916
        %v1243 = vpop.f32.mrf.mxu0
        %v1244 = vadd.f32 %v412, %v1243
        %v1245 = vpop.f32.mrf.mxu0
        %v1246 = vadd.f32 %v412, %v1245
        %1247 = vmatmul.bf16.gmra.mxu0 %v919
        %v1248 = vpop.f32.mrf.mxu0
        %v1249 = vadd.f32 %v412, %v1248
        %v1250 = vpop.f32.mrf.mxu0
        %v1251 = vadd.f32 %v412, %v1250
        %1252 = vmatmul.bf16.gmra.mxu0 %v922
        %v1253 = vpop.f32.mrf.mxu0
        %v1254 = vadd.f32 %v412, %v1253
        %v1255 = vpop.f32.mrf.mxu0
        %v1256 = vadd.f32 %v412, %v1255
        %1257 = vmatmul.bf16.gmra.mxu0 %v925
        %v1258 = vpop.f32.mrf.mxu0
        %v1259 = vadd.f32 %v412, %v1258
        %v1260 = vpop.f32.mrf.mxu0
        %v1261 = vadd.f32 %v412, %v1260
        %1262 = vdwg.mxu0
        %v1263 = vmax.f32 %v944, 0.0
        %v1264 = vmax.f32 %v946, 0.0
        %v1265 = vmax.f32 %v949, 0.0
        %v1266 = vmax.f32 %v951, 0.0
        %v1267 = vmax.f32 %v954, 0.0
        %v1268 = vmax.f32 %v956, 0.0
        %v1269 = vmax.f32 %v959, 0.0
        %v1270 = vmax.f32 %v961, 0.0
        %v1271 = vmax.f32 %v964, 0.0
        %v1272 = vmax.f32 %v966, 0.0
        %v1273 = vmax.f32 %v969, 0.0
        %v1274 = vmax.f32 %v971, 0.0
        %v1275 = vmax.f32 %v974, 0.0
        %v1276 = vmax.f32 %v976, 0.0
        %v1277 = vmax.f32 %v979, 0.0
        %v1278 = vmax.f32 %v981, 0.0
        %v1279 = vmax.f32 %v984, 0.0
        %v1280 = vmax.f32 %v986, 0.0
        %v1281 = vmax.f32 %v989, 0.0
        %v1282 = vmax.f32 %v991, 0.0
        %v1283 = vmax.f32 %v994, 0.0
        %v1284 = vmax.f32 %v996, 0.0
        %v1285 = vmax.f32 %v999, 0.0
        %v1286 = vmax.f32 %v1001, 0.0
        %v1287 = vmax.f32 %v1004, 0.0
        %v1288 = vmax.f32 %v1006, 0.0
        %v1289 = vmax.f32 %v1009, 0.0
        %v1290 = vmax.f32 %v1011, 0.0
        %v1291 = vmax.f32 %v1014, 0.0
        %v1292 = vmax.f32 %v1016, 0.0
        %v1293 = vmax.f32 %v1019, 0.0
        %v1294 = vmax.f32 %v1021, 0.0
        %v1295 = vmax.f32 %v1024, 0.0
        %v1296 = vmax.f32 %v1026, 0.0
        %v1297 = vmax.f32 %v1029, 0.0
        %v1298 = vmax.f32 %v1031, 0.0
        %v1299 = vmax.f32 %v1034, 0.0
        %v1300 = vmax.f32 %v1036, 0.0
        %v1301 = vmax.f32 %v1039, 0.0
        %v1302 = vmax.f32 %v1041, 0.0
        %v1303 = vmax.f32 %v1044, 0.0
        %v1304 = vmax.f32 %v1046, 0.0
        %v1305 = vmax.f32 %v1049, 0.0
        %v1306 = vmax.f32 %v1051, 0.0
        %v1307 = vmax.f32 %v1054, 0.0
        %v1308 = vmax.f32 %v1056, 0.0
        %v1309 = vmax.f32 %v1059, 0.0
        %v1310 = vmax.f32 %v1061, 0.0
        %v1311 = vmax.f32 %v1064, 0.0
        %v1312 = vmax.f32 %v1066, 0.0
        %v1313 = vmax.f32 %v1069, 0.0
        %v1314 = vmax.f32 %v1071, 0.0
        %v1315 = vmax.f32 %v1074, 0.0
        %v1316 = vmax.f32 %v1076, 0.0
        %v1317 = vmax.f32 %v1079, 0.0
        %v1318 = vmax.f32 %v1081, 0.0
        %v1319 = vmax.f32 %v1084, 0.0
        %v1320 = vmax.f32 %v1086, 0.0
        %v1321 = vmax.f32 %v1089, 0.0
        %v1322 = vmax.f32 %v1091, 0.0
        %v1323 = vmax.f32 %v1094, 0.0
        %v1324 = vmax.f32 %v1096, 0.0
        %v1325 = vmax.f32 %v1099, 0.0
        %v1326 = vmax.f32 %v1101, 0.0
        %v1327 = vmax.f32 %v1104, 0.0
        %v1328 = vmax.f32 %v1106, 0.0
        %v1329 = vmax.f32 %v1109, 0.0
        %v1330 = vmax.f32 %v1111, 0.0
        %v1331 = vmax.f32 %v1114, 0.0
        %v1332 = vmax.f32 %v1116, 0.0
        %v1333 = vmax.f32 %v1119, 0.0
        %v1334 = vmax.f32 %v1121, 0.0
        %v1335 = vmax.f32 %v1124, 0.0
        %v1336 = vmax.f32 %v1126, 0.0
        %v1337 = vmax.f32 %v1129, 0.0
        %v1338 = vmax.f32 %v1131, 0.0
        %v1339 = vmax.f32 %v1134, 0.0
        %v1340 = vmax.f32 %v1136, 0.0
        %v1341 = vmax.f32 %v1139, 0.0
        %v1342 = vmax.f32 %v1141, 0.0
        %v1343 = vmax.f32 %v1144, 0.0
        %v1344 = vmax.f32 %v1146, 0.0
        %v1345 = vmax.f32 %v1149, 0.0
        %v1346 = vmax.f32 %v1151, 0.0
        %v1347 = vmax.f32 %v1154, 0.0
        %v1348 = vmax.f32 %v1156, 0.0
        %v1349 = vmax.f32 %v1159, 0.0
        %v1350 = vmax.f32 %v1161, 0.0
        %v1351 = vmax.f32 %v1164, 0.0
        %v1352 = vmax.f32 %v1166, 0.0
        %v1353 = vmax.f32 %v1169, 0.0
        %v1354 = vmax.f32 %v1171, 0.0
        %v1355 = vmax.f32 %v1174, 0.0
        %v1356 = vmax.f32 %v1176, 0.0
        %v1357 = vmax.f32 %v1179, 0.0
        %v1358 = vmax.f32 %v1181, 0.0
        %v1359 = vmax.f32 %v1184, 0.0
        %v1360 = vmax.f32 %v1186, 0.0
        %v1361 = vmax.f32 %v1189, 0.0
        %v1362 = vmax.f32 %v1191, 0.0
        %v1363 = vmax.f32 %v1194, 0.0
        %v1364 = vmax.f32 %v1196, 0.0
        %v1365 = vmax.f32 %v1199, 0.0
        %v1366 = vmax.f32 %v1201, 0.0
        %v1367 = vmax.f32 %v1204, 0.0
        %v1368 = vmax.f32 %v1206, 0.0
        %v1369 = vmax.f32 %v1209, 0.0
        %v1370 = vmax.f32 %v1211, 0.0
        %v1371 = vmax.f32 %v1214, 0.0
        %v1372 = vmax.f32 %v1216, 0.0
        %v1373 = vmax.f32 %v1219, 0.0
        %v1374 = vmax.f32 %v1221, 0.0
        %v1375 = vmax.f32 %v1224, 0.0
        %v1376 = vmax.f32 %v1226, 0.0
        %v1377 = vmax.f32 %v1229, 0.0
        %v1378 = vmax.f32 %v1231, 0.0
        %v1379 = vmax.f32 %v1234, 0.0
        %v1380 = vmax.f32 %v1236, 0.0
        %v1381 = vmax.f32 %v1239, 0.0
        %v1382 = vmax.f32 %v1241, 0.0
        %v1383 = vmax.f32 %v1244, 0.0
        %v1384 = vmax.f32 %v1246, 0.0
        %v1385 = vmax.f32 %v1249, 0.0
        %v1386 = vmax.f32 %v1251, 0.0
        %v1387 = vmax.f32 %v1254, 0.0
        %v1388 = vmax.f32 %v1256, 0.0
        %v1389 = vmax.f32 %v1259, 0.0
        %v1390 = vmax.f32 %v1261, 0.0
        %v1391 = vpack.c.bf16 %v1264, %v1263
        %v1392 = vpack.c.bf16 %v1266, %v1265
        %v1393 = vpack.c.bf16 %v1268, %v1267
        %v1394 = vpack.c.bf16 %v1270, %v1269
        %v1395 = vpack.c.bf16 %v1272, %v1271
        %v1396 = vpack.c.bf16 %v1274, %v1273
        %v1397 = vpack.c.bf16 %v1276, %v1275
        %v1398 = vpack.c.bf16 %v1278, %v1277
        %v1399 = vpack.c.bf16 %v1280, %v1279
        %v1400 = vpack.c.bf16 %v1282, %v1281
        %v1401 = vpack.c.bf16 %v1284, %v1283
        %v1402 = vpack.c.bf16 %v1286, %v1285
        %v1403 = vpack.c.bf16 %v1288, %v1287
        %v1404 = vpack.c.bf16 %v1290, %v1289
        %v1405 = vpack.c.bf16 %v1292, %v1291
        %v1406 = vpack.c.bf16 %v1294, %v1293
        %v1407 = vpack.c.bf16 %v1296, %v1295
        %v1408 = vpack.c.bf16 %v1298, %v1297
        %v1409 = vpack.c.bf16 %v1300, %v1299
        %v1410 = vpack.c.bf16 %v1302, %v1301
        %v1411 = vpack.c.bf16 %v1304, %v1303
        %v1412 = vpack.c.bf16 %v1306, %v1305
        %v1413 = vpack.c.bf16 %v1308, %v1307
        %v1414 = vpack.c.bf16 %v1310, %v1309
        %v1415 = vpack.c.bf16 %v1312, %v1311
        %v1416 = vpack.c.bf16 %v1314, %v1313
        %v1417 = vpack.c.bf16 %v1316, %v1315
        %v1418 = vpack.c.bf16 %v1318, %v1317
        %v1419 = vpack.c.bf16 %v1320, %v1319
        %v1420 = vpack.c.bf16 %v1322, %v1321
        %v1421 = vpack.c.bf16 %v1324, %v1323
        %v1422 = vpack.c.bf16 %v1326, %v1325
        %v1423 = vpack.c.bf16 %v1328, %v1327
        %v1424 = vpack.c.bf16 %v1330, %v1329
        %v1425 = vpack.c.bf16 %v1332, %v1331
        %v1426 = vpack.c.bf16 %v1334, %v1333
        %v1427 = vpack.c.bf16 %v1336, %v1335
        %v1428 = vpack.c.bf16 %v1338, %v1337
        %v1429 = vpack.c.bf16 %v1340, %v1339
        %v1430 = vpack.c.bf16 %v1342, %v1341
        %v1431 = vpack.c.bf16 %v1344, %v1343
        %v1432 = vpack.c.bf16 %v1346, %v1345
        %v1433 = vpack.c.bf16 %v1348, %v1347
        %v1434 = vpack.c.bf16 %v1350, %v1349
        %v1435 = vpack.c.bf16 %v1352, %v1351
        %v1436 = vpack.c.bf16 %v1354, %v1353
        %v1437 = vpack.c.bf16 %v1356, %v1355
        %v1438 = vpack.c.bf16 %v1358, %v1357
        %v1439 = vpack.c.bf16 %v1360, %v1359
        %v1440 = vpack.c.bf16 %v1362, %v1361
        %v1441 = vpack.c.bf16 %v1364, %v1363
        %v1442 = vpack.c.bf16 %v1366, %v1365
        %v1443 = vpack.c.bf16 %v1368, %v1367
        %v1444 = vpack.c.bf16 %v1370, %v1369
        %v1445 = vpack.c.bf16 %v1372, %v1371
        %v1446 = vpack.c.bf16 %v1374, %v1373
        %v1447 = vpack.c.bf16 %v1376, %v1375
        %v1448 = vpack.c.bf16 %v1378, %v1377
        %v1449 = vpack.c.bf16 %v1380, %v1379
        %v1450 = vpack.c.bf16 %v1382, %v1381
        %v1451 = vpack.c.bf16 %v1384, %v1383
        %v1452 = vpack.c.bf16 %v1386, %v1385
        %v1453 = vpack.c.bf16 %v1388, %v1387
        %v1454 = vpack.c.bf16 %v1390, %v1389
        %v1455 = vld [vmem:[%s3] sm:$0xf]
        %v1456 = vld [vmem:[%s3 + $0x4] sm:$0xf]
        %v1457 = vld [vmem:[%s3 + $0x8] sm:$0xf]
        %v1458 = vld [vmem:[%s3 + $0xc] sm:$0xf]
        %v1459 = vld [vmem:[%s3 + $0x10] sm:$0xf]
        %v1460 = vld [vmem:[%s3 + $0x14] sm:$0xf]
        %v1461 = vld [vmem:[%s3 + $0x18] sm:$0xf]
        %v1462 = vld [vmem:[%s3 + $0x1c] sm:$0xf]
        %v1463 = vld [vmem:[%s4] sm:$0x1]
        %v1465 = vperm.slane %v1463, 0
        %v1475 = vunpack.c.l.b16 %v1455
        %v1476 = vunpack.c.l.b16 %v1456
        %v1477 = vunpack.c.l.b16 %v1457
        %v1478 = vunpack.c.l.b16 %v1458
        %v1479 = vunpack.c.l.b16 %v1459
        %v1480 = vunpack.c.l.b16 %v1460
        %v1481 = vunpack.c.l.b16 %v1461
        %v1482 = vunpack.c.l.b16 %v1462
        %v1483 = vpack.c.b16 %v1476, %v1475
        %v1484 = vpack.c.b16 %v1478, %v1477
        %v1485 = vpack.c.b16 %v1480, %v1479
        %v1486 = vpack.c.b16 %v1482, %v1481
        %vm1491 = vcmask 523264
        %v1493 = vsel %vm1491, %v1391, 0
        %v1496 = vsel %vm1491, %v1392, 0
        %v1499 = vsel %vm1491, %v1393, 0
        %v1502 = vsel %vm1491, %v1394, 0
        %v1505 = vsel %vm1491, %v1395, 0
        %v1508 = vsel %vm1491, %v1396, 0
        %v1511 = vsel %vm1491, %v1397, 0
        %v1514 = vsel %vm1491, %v1398, 0
        %v1517 = vsel %vm1491, %v1399, 0
        %v1520 = vsel %vm1491, %v1400, 0
        %v1523 = vsel %vm1491, %v1401, 0
        %v1526 = vsel %vm1491, %v1402, 0
        %v1529 = vsel %vm1491, %v1403, 0
        %v1532 = vsel %vm1491, %v1404, 0
        %v1535 = vsel %vm1491, %v1405, 0
        %v1538 = vsel %vm1491, %v1406, 0
        %v1541 = vsel %vm1491, %v1407, 0
        %v1544 = vsel %vm1491, %v1408, 0
        %v1547 = vsel %vm1491, %v1409, 0
        %v1550 = vsel %vm1491, %v1410, 0
        %v1553 = vsel %vm1491, %v1411, 0
        %v1556 = vsel %vm1491, %v1412, 0
        %v1559 = vsel %vm1491, %v1413, 0
        %v1562 = vsel %vm1491, %v1414, 0
        %v1565 = vsel %vm1491, %v1415, 0
        %v1568 = vsel %vm1491, %v1416, 0
        %v1571 = vsel %vm1491, %v1417, 0
        %v1574 = vsel %vm1491, %v1418, 0
        %v1577 = vsel %vm1491, %v1419, 0
        %v1580 = vsel %vm1491, %v1420, 0
        %v1583 = vsel %vm1491, %v1421, 0
        %v1586 = vsel %vm1491, %v1422, 0
        %v1589 = vsel %vm1491, %v1423, 0
        %v1592 = vsel %vm1491, %v1424, 0
        %v1595 = vsel %vm1491, %v1425, 0
        %v1598 = vsel %vm1491, %v1426, 0
        %v1601 = vsel %vm1491, %v1427, 0
        %v1604 = vsel %vm1491, %v1428, 0
        %v1607 = vsel %vm1491, %v1429, 0
        %v1610 = vsel %vm1491, %v1430, 0
        %v1613 = vsel %vm1491, %v1431, 0
        %v1616 = vsel %vm1491, %v1432, 0
        %v1619 = vsel %vm1491, %v1433, 0
        %v1622 = vsel %vm1491, %v1434, 0
        %v1625 = vsel %vm1491, %v1435, 0
        %v1628 = vsel %vm1491, %v1436, 0
        %v1631 = vsel %vm1491, %v1437, 0
        %v1634 = vsel %vm1491, %v1438, 0
        %v1637 = vsel %vm1491, %v1439, 0
        %v1640 = vsel %vm1491, %v1440, 0
        %v1643 = vsel %vm1491, %v1441, 0
        %v1646 = vsel %vm1491, %v1442, 0
        %v1649 = vsel %vm1491, %v1443, 0
        %v1652 = vsel %vm1491, %v1444, 0
        %v1655 = vsel %vm1491, %v1445, 0
        %v1658 = vsel %vm1491, %v1446, 0
        %v1661 = vsel %vm1491, %v1447, 0
        %v1664 = vsel %vm1491, %v1448, 0
        %v1667 = vsel %vm1491, %v1449, 0
        %v1670 = vsel %vm1491, %v1450, 0
        %v1673 = vsel %vm1491, %v1451, 0
        %v1676 = vsel %vm1491, %v1452, 0
        %v1679 = vsel %vm1491, %v1453, 0
        %v1682 = vsel %vm1491, %v1454, 0
        %1684 = vmatpush.bf16.msra.mxu0 0
        %1685 = vmatpush.bf16.msra.mxu0 0
        %1686 = vmatpush.bf16.msra.mxu0 0
        %1687 = vmatpush.bf16.msra.mxu0 0
        %1688 = vmatpush.bf16.msra.mxu0 %v1486
        %1689 = vmatpush.bf16.msra.mxu0 %v1485
        %1690 = vmatpush.bf16.msra.mxu0 %v1484
        %1691 = vmatpush.bf16.msra.mxu0 %v1483
        %1692 = vmatmul.bf16.gmra.mxu0 %v1493
        %v1693 = vpop.f32.mrf.mxu0
        %v1694 = vadd.f32 %v1465, %v1693
        %v1695 = vpop.f32.mrf.mxu0
        %v1696 = vadd.f32 %v1465, %v1695
        %1697 = vmatmul.bf16.gmra.mxu0 %v1496
        %v1698 = vpop.f32.mrf.mxu0
        %v1699 = vadd.f32 %v1465, %v1698
        %v1700 = vpop.f32.mrf.mxu0
        %v1701 = vadd.f32 %v1465, %v1700
        %1702 = vmatmul.bf16.gmra.mxu0 %v1499
        %v1703 = vpop.f32.mrf.mxu0
        %v1704 = vadd.f32 %v1465, %v1703
        %v1705 = vpop.f32.mrf.mxu0
        %v1706 = vadd.f32 %v1465, %v1705
        %1707 = vmatmul.bf16.gmra.mxu0 %v1502
        %v1708 = vpop.f32.mrf.mxu0
        %v1709 = vadd.f32 %v1465, %v1708
        %v1710 = vpop.f32.mrf.mxu0
        %v1711 = vadd.f32 %v1465, %v1710
        %1712 = vmatmul.bf16.gmra.mxu0 %v1505
        %v1713 = vpop.f32.mrf.mxu0
        %v1714 = vadd.f32 %v1465, %v1713
        %v1715 = vpop.f32.mrf.mxu0
        %v1716 = vadd.f32 %v1465, %v1715
        %1717 = vmatmul.bf16.gmra.mxu0 %v1508
        %v1718 = vpop.f32.mrf.mxu0
        %v1719 = vadd.f32 %v1465, %v1718
        %v1720 = vpop.f32.mrf.mxu0
        %v1721 = vadd.f32 %v1465, %v1720
        %1722 = vmatmul.bf16.gmra.mxu0 %v1511
        %v1723 = vpop.f32.mrf.mxu0
        %v1724 = vadd.f32 %v1465, %v1723
        %v1725 = vpop.f32.mrf.mxu0
        %v1726 = vadd.f32 %v1465, %v1725
        %1727 = vmatmul.bf16.gmra.mxu0 %v1514
        %v1728 = vpop.f32.mrf.mxu0
        %v1729 = vadd.f32 %v1465, %v1728
        %v1730 = vpop.f32.mrf.mxu0
        %v1731 = vadd.f32 %v1465, %v1730
        %1732 = vmatmul.bf16.gmra.mxu0 %v1517
        %v1733 = vpop.f32.mrf.mxu0
        %v1734 = vadd.f32 %v1465, %v1733
        %v1735 = vpop.f32.mrf.mxu0
        %v1736 = vadd.f32 %v1465, %v1735
        %1737 = vmatmul.bf16.gmra.mxu0 %v1520
        %v1738 = vpop.f32.mrf.mxu0
        %v1739 = vadd.f32 %v1465, %v1738
        %v1740 = vpop.f32.mrf.mxu0
        %v1741 = vadd.f32 %v1465, %v1740
        %1742 = vmatmul.bf16.gmra.mxu0 %v1523
        %v1743 = vpop.f32.mrf.mxu0
        %v1744 = vadd.f32 %v1465, %v1743
        %v1745 = vpop.f32.mrf.mxu0
        %v1746 = vadd.f32 %v1465, %v1745
        %1747 = vmatmul.bf16.gmra.mxu0 %v1526
        %v1748 = vpop.f32.mrf.mxu0
        %v1749 = vadd.f32 %v1465, %v1748
        %v1750 = vpop.f32.mrf.mxu0
        %v1751 = vadd.f32 %v1465, %v1750
        %1752 = vmatmul.bf16.gmra.mxu0 %v1529
        %v1753 = vpop.f32.mrf.mxu0
        %v1754 = vadd.f32 %v1465, %v1753
        %v1755 = vpop.f32.mrf.mxu0
        %v1756 = vadd.f32 %v1465, %v1755
        %1757 = vmatmul.bf16.gmra.mxu0 %v1532
        %v1758 = vpop.f32.mrf.mxu0
        %v1759 = vadd.f32 %v1465, %v1758
        %v1760 = vpop.f32.mrf.mxu0
        %v1761 = vadd.f32 %v1465, %v1760
        %1762 = vmatmul.bf16.gmra.mxu0 %v1535
        %v1763 = vpop.f32.mrf.mxu0
        %v1764 = vadd.f32 %v1465, %v1763
        %v1765 = vpop.f32.mrf.mxu0
        %v1766 = vadd.f32 %v1465, %v1765
        %1767 = vmatmul.bf16.gmra.mxu0 %v1538
        %v1768 = vpop.f32.mrf.mxu0
        %v1769 = vadd.f32 %v1465, %v1768
        %v1770 = vpop.f32.mrf.mxu0
        %v1771 = vadd.f32 %v1465, %v1770
        %1772 = vmatmul.bf16.gmra.mxu0 %v1541
        %v1773 = vpop.f32.mrf.mxu0
        %v1774 = vadd.f32 %v1465, %v1773
        %v1775 = vpop.f32.mrf.mxu0
        %v1776 = vadd.f32 %v1465, %v1775
        %1777 = vmatmul.bf16.gmra.mxu0 %v1544
        %v1778 = vpop.f32.mrf.mxu0
        %v1779 = vadd.f32 %v1465, %v1778
        %v1780 = vpop.f32.mrf.mxu0
        %v1781 = vadd.f32 %v1465, %v1780
        %1782 = vmatmul.bf16.gmra.mxu0 %v1547
        %v1783 = vpop.f32.mrf.mxu0
        %v1784 = vadd.f32 %v1465, %v1783
        %v1785 = vpop.f32.mrf.mxu0
        %v1786 = vadd.f32 %v1465, %v1785
        %1787 = vmatmul.bf16.gmra.mxu0 %v1550
        %v1788 = vpop.f32.mrf.mxu0
        %v1789 = vadd.f32 %v1465, %v1788
        %v1790 = vpop.f32.mrf.mxu0
        %v1791 = vadd.f32 %v1465, %v1790
        %1792 = vmatmul.bf16.gmra.mxu0 %v1553
        %v1793 = vpop.f32.mrf.mxu0
        %v1794 = vadd.f32 %v1465, %v1793
        %v1795 = vpop.f32.mrf.mxu0
        %v1796 = vadd.f32 %v1465, %v1795
        %1797 = vmatmul.bf16.gmra.mxu0 %v1556
        %v1798 = vpop.f32.mrf.mxu0
        %v1799 = vadd.f32 %v1465, %v1798
        %v1800 = vpop.f32.mrf.mxu0
        %v1801 = vadd.f32 %v1465, %v1800
        %1802 = vmatmul.bf16.gmra.mxu0 %v1559
        %v1803 = vpop.f32.mrf.mxu0
        %v1804 = vadd.f32 %v1465, %v1803
        %v1805 = vpop.f32.mrf.mxu0
        %v1806 = vadd.f32 %v1465, %v1805
        %1807 = vmatmul.bf16.gmra.mxu0 %v1562
        %v1808 = vpop.f32.mrf.mxu0
        %v1809 = vadd.f32 %v1465, %v1808
        %v1810 = vpop.f32.mrf.mxu0
        %v1811 = vadd.f32 %v1465, %v1810
        %1812 = vmatmul.bf16.gmra.mxu0 %v1565
        %v1813 = vpop.f32.mrf.mxu0
        %v1814 = vadd.f32 %v1465, %v1813
        %v1815 = vpop.f32.mrf.mxu0
        %v1816 = vadd.f32 %v1465, %v1815
        %1817 = vmatmul.bf16.gmra.mxu0 %v1568
        %v1818 = vpop.f32.mrf.mxu0
        %v1819 = vadd.f32 %v1465, %v1818
        %v1820 = vpop.f32.mrf.mxu0
        %v1821 = vadd.f32 %v1465, %v1820
        %1822 = vmatmul.bf16.gmra.mxu0 %v1571
        %v1823 = vpop.f32.mrf.mxu0
        %v1824 = vadd.f32 %v1465, %v1823
        %v1825 = vpop.f32.mrf.mxu0
        %v1826 = vadd.f32 %v1465, %v1825
        %1827 = vmatmul.bf16.gmra.mxu0 %v1574
        %v1828 = vpop.f32.mrf.mxu0
        %v1829 = vadd.f32 %v1465, %v1828
        %v1830 = vpop.f32.mrf.mxu0
        %v1831 = vadd.f32 %v1465, %v1830
        %1832 = vmatmul.bf16.gmra.mxu0 %v1577
        %v1833 = vpop.f32.mrf.mxu0
        %v1834 = vadd.f32 %v1465, %v1833
        %v1835 = vpop.f32.mrf.mxu0
        %v1836 = vadd.f32 %v1465, %v1835
        %1837 = vmatmul.bf16.gmra.mxu0 %v1580
        %v1838 = vpop.f32.mrf.mxu0
        %v1839 = vadd.f32 %v1465, %v1838
        %v1840 = vpop.f32.mrf.mxu0
        %v1841 = vadd.f32 %v1465, %v1840
        %1842 = vmatmul.bf16.gmra.mxu0 %v1583
        %v1843 = vpop.f32.mrf.mxu0
        %v1844 = vadd.f32 %v1465, %v1843
        %v1845 = vpop.f32.mrf.mxu0
        %v1846 = vadd.f32 %v1465, %v1845
        %1847 = vmatmul.bf16.gmra.mxu0 %v1586
        %v1848 = vpop.f32.mrf.mxu0
        %v1849 = vadd.f32 %v1465, %v1848
        %v1850 = vpop.f32.mrf.mxu0
        %v1851 = vadd.f32 %v1465, %v1850
        %1852 = vmatmul.bf16.gmra.mxu0 %v1589
        %v1853 = vpop.f32.mrf.mxu0
        %v1854 = vadd.f32 %v1465, %v1853
        %v1855 = vpop.f32.mrf.mxu0
        %v1856 = vadd.f32 %v1465, %v1855
        %1857 = vmatmul.bf16.gmra.mxu0 %v1592
        %v1858 = vpop.f32.mrf.mxu0
        %v1859 = vadd.f32 %v1465, %v1858
        %v1860 = vpop.f32.mrf.mxu0
        %v1861 = vadd.f32 %v1465, %v1860
        %1862 = vmatmul.bf16.gmra.mxu0 %v1595
        %v1863 = vpop.f32.mrf.mxu0
        %v1864 = vadd.f32 %v1465, %v1863
        %v1865 = vpop.f32.mrf.mxu0
        %v1866 = vadd.f32 %v1465, %v1865
        %1867 = vmatmul.bf16.gmra.mxu0 %v1598
        %v1868 = vpop.f32.mrf.mxu0
        %v1869 = vadd.f32 %v1465, %v1868
        %v1870 = vpop.f32.mrf.mxu0
        %v1871 = vadd.f32 %v1465, %v1870
        %1872 = vmatmul.bf16.gmra.mxu0 %v1601
        %v1873 = vpop.f32.mrf.mxu0
        %v1874 = vadd.f32 %v1465, %v1873
        %v1875 = vpop.f32.mrf.mxu0
        %v1876 = vadd.f32 %v1465, %v1875
        %1877 = vmatmul.bf16.gmra.mxu0 %v1604
        %v1878 = vpop.f32.mrf.mxu0
        %v1879 = vadd.f32 %v1465, %v1878
        %v1880 = vpop.f32.mrf.mxu0
        %v1881 = vadd.f32 %v1465, %v1880
        %1882 = vmatmul.bf16.gmra.mxu0 %v1607
        %v1883 = vpop.f32.mrf.mxu0
        %v1884 = vadd.f32 %v1465, %v1883
        %v1885 = vpop.f32.mrf.mxu0
        %v1886 = vadd.f32 %v1465, %v1885
        %1887 = vmatmul.bf16.gmra.mxu0 %v1610
        %v1888 = vpop.f32.mrf.mxu0
        %v1889 = vadd.f32 %v1465, %v1888
        %v1890 = vpop.f32.mrf.mxu0
        %v1891 = vadd.f32 %v1465, %v1890
        %1892 = vmatmul.bf16.gmra.mxu0 %v1613
        %v1893 = vpop.f32.mrf.mxu0
        %v1894 = vadd.f32 %v1465, %v1893
        %v1895 = vpop.f32.mrf.mxu0
        %v1896 = vadd.f32 %v1465, %v1895
        %1897 = vmatmul.bf16.gmra.mxu0 %v1616
        %v1898 = vpop.f32.mrf.mxu0
        %v1899 = vadd.f32 %v1465, %v1898
        %v1900 = vpop.f32.mrf.mxu0
        %v1901 = vadd.f32 %v1465, %v1900
        %1902 = vmatmul.bf16.gmra.mxu0 %v1619
        %v1903 = vpop.f32.mrf.mxu0
        %v1904 = vadd.f32 %v1465, %v1903
        %v1905 = vpop.f32.mrf.mxu0
        %v1906 = vadd.f32 %v1465, %v1905
        %1907 = vmatmul.bf16.gmra.mxu0 %v1622
        %v1908 = vpop.f32.mrf.mxu0
        %v1909 = vadd.f32 %v1465, %v1908
        %v1910 = vpop.f32.mrf.mxu0
        %v1911 = vadd.f32 %v1465, %v1910
        %1912 = vmatmul.bf16.gmra.mxu0 %v1625
        %v1913 = vpop.f32.mrf.mxu0
        %v1914 = vadd.f32 %v1465, %v1913
        %v1915 = vpop.f32.mrf.mxu0
        %v1916 = vadd.f32 %v1465, %v1915
        %1917 = vmatmul.bf16.gmra.mxu0 %v1628
        %v1918 = vpop.f32.mrf.mxu0
        %v1919 = vadd.f32 %v1465, %v1918
        %v1920 = vpop.f32.mrf.mxu0
        %v1921 = vadd.f32 %v1465, %v1920
        %1922 = vmatmul.bf16.gmra.mxu0 %v1631
        %v1923 = vpop.f32.mrf.mxu0
        %v1924 = vadd.f32 %v1465, %v1923
        %v1925 = vpop.f32.mrf.mxu0
        %v1926 = vadd.f32 %v1465, %v1925
        %1927 = vmatmul.bf16.gmra.mxu0 %v1634
        %v1928 = vpop.f32.mrf.mxu0
        %v1929 = vadd.f32 %v1465, %v1928
        %v1930 = vpop.f32.mrf.mxu0
        %v1931 = vadd.f32 %v1465, %v1930
        %1932 = vmatmul.bf16.gmra.mxu0 %v1637
        %v1933 = vpop.f32.mrf.mxu0
        %v1934 = vadd.f32 %v1465, %v1933
        %v1935 = vpop.f32.mrf.mxu0
        %v1936 = vadd.f32 %v1465, %v1935
        %1937 = vmatmul.bf16.gmra.mxu0 %v1640
        %v1938 = vpop.f32.mrf.mxu0
        %v1939 = vadd.f32 %v1465, %v1938
        %v1940 = vpop.f32.mrf.mxu0
        %v1941 = vadd.f32 %v1465, %v1940
        %1942 = vmatmul.bf16.gmra.mxu0 %v1643
        %v1943 = vpop.f32.mrf.mxu0
        %v1944 = vadd.f32 %v1465, %v1943
        %v1945 = vpop.f32.mrf.mxu0
        %v1946 = vadd.f32 %v1465, %v1945
        %1947 = vmatmul.bf16.gmra.mxu0 %v1646
        %v1948 = vpop.f32.mrf.mxu0
        %v1949 = vadd.f32 %v1465, %v1948
        %v1950 = vpop.f32.mrf.mxu0
        %v1951 = vadd.f32 %v1465, %v1950
        %1952 = vmatmul.bf16.gmra.mxu0 %v1649
        %v1953 = vpop.f32.mrf.mxu0
        %v1954 = vadd.f32 %v1465, %v1953
        %v1955 = vpop.f32.mrf.mxu0
        %v1956 = vadd.f32 %v1465, %v1955
        %1957 = vmatmul.bf16.gmra.mxu0 %v1652
        %v1958 = vpop.f32.mrf.mxu0
        %v1959 = vadd.f32 %v1465, %v1958
        %v1960 = vpop.f32.mrf.mxu0
        %v1961 = vadd.f32 %v1465, %v1960
        %1962 = vmatmul.bf16.gmra.mxu0 %v1655
        %v1963 = vpop.f32.mrf.mxu0
        %v1964 = vadd.f32 %v1465, %v1963
        %v1965 = vpop.f32.mrf.mxu0
        %v1966 = vadd.f32 %v1465, %v1965
        %1967 = vmatmul.bf16.gmra.mxu0 %v1658
        %v1968 = vpop.f32.mrf.mxu0
        %v1969 = vadd.f32 %v1465, %v1968
        %v1970 = vpop.f32.mrf.mxu0
        %v1971 = vadd.f32 %v1465, %v1970
        %1972 = vmatmul.bf16.gmra.mxu0 %v1661
        %v1973 = vpop.f32.mrf.mxu0
        %v1974 = vadd.f32 %v1465, %v1973
        %v1975 = vpop.f32.mrf.mxu0
        %v1976 = vadd.f32 %v1465, %v1975
        %1977 = vmatmul.bf16.gmra.mxu0 %v1664
        %v1978 = vpop.f32.mrf.mxu0
        %v1979 = vadd.f32 %v1465, %v1978
        %v1980 = vpop.f32.mrf.mxu0
        %v1981 = vadd.f32 %v1465, %v1980
        %1982 = vmatmul.bf16.gmra.mxu0 %v1667
        %v1983 = vpop.f32.mrf.mxu0
        %v1984 = vadd.f32 %v1465, %v1983
        %v1985 = vpop.f32.mrf.mxu0
        %v1986 = vadd.f32 %v1465, %v1985
        %1987 = vmatmul.bf16.gmra.mxu0 %v1670
        %v1988 = vpop.f32.mrf.mxu0
        %v1989 = vadd.f32 %v1465, %v1988
        %v1990 = vpop.f32.mrf.mxu0
        %v1991 = vadd.f32 %v1465, %v1990
        %1992 = vmatmul.bf16.gmra.mxu0 %v1673
        %v1993 = vpop.f32.mrf.mxu0
        %v1994 = vadd.f32 %v1465, %v1993
        %v1995 = vpop.f32.mrf.mxu0
        %v1996 = vadd.f32 %v1465, %v1995
        %1997 = vmatmul.bf16.gmra.mxu0 %v1676
        %v1998 = vpop.f32.mrf.mxu0
        %v1999 = vadd.f32 %v1465, %v1998
        %v2000 = vpop.f32.mrf.mxu0
        %v2001 = vadd.f32 %v1465, %v2000
        %2002 = vmatmul.bf16.gmra.mxu0 %v1679
        %v2003 = vpop.f32.mrf.mxu0
        %v2004 = vadd.f32 %v1465, %v2003
        %v2005 = vpop.f32.mrf.mxu0
        %v2006 = vadd.f32 %v1465, %v2005
        %2007 = vmatmul.bf16.gmra.mxu0 %v1682
        %v2008 = vpop.f32.mrf.mxu0
        %v2009 = vadd.f32 %v1465, %v2008
        %v2010 = vpop.f32.mrf.mxu0
        %v2011 = vadd.f32 %v1465, %v2010
        %2012 = vdwg.mxu0
        %v2013 = vmax.f32 %v1694, 0.0
        %v2014 = vmax.f32 %v1696, 0.0
        %v2015 = vmax.f32 %v1699, 0.0
        %v2016 = vmax.f32 %v1701, 0.0
        %v2017 = vmax.f32 %v1704, 0.0
        %v2018 = vmax.f32 %v1706, 0.0
        %v2019 = vmax.f32 %v1709, 0.0
        %v2020 = vmax.f32 %v1711, 0.0
        %v2021 = vmax.f32 %v1714, 0.0
        %v2022 = vmax.f32 %v1716, 0.0
        %v2023 = vmax.f32 %v1719, 0.0
        %v2024 = vmax.f32 %v1721, 0.0
        %v2025 = vmax.f32 %v1724, 0.0
        %v2026 = vmax.f32 %v1726, 0.0
        %v2027 = vmax.f32 %v1729, 0.0
        %v2028 = vmax.f32 %v1731, 0.0
        %v2029 = vmax.f32 %v1734, 0.0
        %v2030 = vmax.f32 %v1736, 0.0
        %v2031 = vmax.f32 %v1739, 0.0
        %v2032 = vmax.f32 %v1741, 0.0
        %v2033 = vmax.f32 %v1744, 0.0
        %v2034 = vmax.f32 %v1746, 0.0
        %v2035 = vmax.f32 %v1749, 0.0
        %v2036 = vmax.f32 %v1751, 0.0
        %v2037 = vmax.f32 %v1754, 0.0
        %v2038 = vmax.f32 %v1756, 0.0
        %v2039 = vmax.f32 %v1759, 0.0
        %v2040 = vmax.f32 %v1761, 0.0
        %v2041 = vmax.f32 %v1764, 0.0
        %v2042 = vmax.f32 %v1766, 0.0
        %v2043 = vmax.f32 %v1769, 0.0
        %v2044 = vmax.f32 %v1771, 0.0
        %v2045 = vmax.f32 %v1774, 0.0
        %v2046 = vmax.f32 %v1776, 0.0
        %v2047 = vmax.f32 %v1779, 0.0
        %v2048 = vmax.f32 %v1781, 0.0
        %v2049 = vmax.f32 %v1784, 0.0
        %v2050 = vmax.f32 %v1786, 0.0
        %v2051 = vmax.f32 %v1789, 0.0
        %v2052 = vmax.f32 %v1791, 0.0
        %v2053 = vmax.f32 %v1794, 0.0
        %v2054 = vmax.f32 %v1796, 0.0
        %v2055 = vmax.f32 %v1799, 0.0
        %v2056 = vmax.f32 %v1801, 0.0
        %v2057 = vmax.f32 %v1804, 0.0
        %v2058 = vmax.f32 %v1806, 0.0
        %v2059 = vmax.f32 %v1809, 0.0
        %v2060 = vmax.f32 %v1811, 0.0
        %v2061 = vmax.f32 %v1814, 0.0
        %v2062 = vmax.f32 %v1816, 0.0
        %v2063 = vmax.f32 %v1819, 0.0
        %v2064 = vmax.f32 %v1821, 0.0
        %v2065 = vmax.f32 %v1824, 0.0
        %v2066 = vmax.f32 %v1826, 0.0
        %v2067 = vmax.f32 %v1829, 0.0
        %v2068 = vmax.f32 %v1831, 0.0
        %v2069 = vmax.f32 %v1834, 0.0
        %v2070 = vmax.f32 %v1836, 0.0
        %v2071 = vmax.f32 %v1839, 0.0
        %v2072 = vmax.f32 %v1841, 0.0
        %v2073 = vmax.f32 %v1844, 0.0
        %v2074 = vmax.f32 %v1846, 0.0
        %v2075 = vmax.f32 %v1849, 0.0
        %v2076 = vmax.f32 %v1851, 0.0
        %v2077 = vmax.f32 %v1854, 0.0
        %v2078 = vmax.f32 %v1856, 0.0
        %v2079 = vmax.f32 %v1859, 0.0
        %v2080 = vmax.f32 %v1861, 0.0
        %v2081 = vmax.f32 %v1864, 0.0
        %v2082 = vmax.f32 %v1866, 0.0
        %v2083 = vmax.f32 %v1869, 0.0
        %v2084 = vmax.f32 %v1871, 0.0
        %v2085 = vmax.f32 %v1874, 0.0
        %v2086 = vmax.f32 %v1876, 0.0
        %v2087 = vmax.f32 %v1879, 0.0
        %v2088 = vmax.f32 %v1881, 0.0
        %v2089 = vmax.f32 %v1884, 0.0
        %v2090 = vmax.f32 %v1886, 0.0
        %v2091 = vmax.f32 %v1889, 0.0
        %v2092 = vmax.f32 %v1891, 0.0
        %v2093 = vmax.f32 %v1894, 0.0
        %v2094 = vmax.f32 %v1896, 0.0
        %v2095 = vmax.f32 %v1899, 0.0
        %v2096 = vmax.f32 %v1901, 0.0
        %v2097 = vmax.f32 %v1904, 0.0
        %v2098 = vmax.f32 %v1906, 0.0
        %v2099 = vmax.f32 %v1909, 0.0
        %v2100 = vmax.f32 %v1911, 0.0
        %v2101 = vmax.f32 %v1914, 0.0
        %v2102 = vmax.f32 %v1916, 0.0
        %v2103 = vmax.f32 %v1919, 0.0
        %v2104 = vmax.f32 %v1921, 0.0
        %v2105 = vmax.f32 %v1924, 0.0
        %v2106 = vmax.f32 %v1926, 0.0
        %v2107 = vmax.f32 %v1929, 0.0
        %v2108 = vmax.f32 %v1931, 0.0
        %v2109 = vmax.f32 %v1934, 0.0
        %v2110 = vmax.f32 %v1936, 0.0
        %v2111 = vmax.f32 %v1939, 0.0
        %v2112 = vmax.f32 %v1941, 0.0
        %v2113 = vmax.f32 %v1944, 0.0
        %v2114 = vmax.f32 %v1946, 0.0
        %v2115 = vmax.f32 %v1949, 0.0
        %v2116 = vmax.f32 %v1951, 0.0
        %v2117 = vmax.f32 %v1954, 0.0
        %v2118 = vmax.f32 %v1956, 0.0
        %v2119 = vmax.f32 %v1959, 0.0
        %v2120 = vmax.f32 %v1961, 0.0
        %v2121 = vmax.f32 %v1964, 0.0
        %v2122 = vmax.f32 %v1966, 0.0
        %v2123 = vmax.f32 %v1969, 0.0
        %v2124 = vmax.f32 %v1971, 0.0
        %v2125 = vmax.f32 %v1974, 0.0
        %v2126 = vmax.f32 %v1976, 0.0
        %v2127 = vmax.f32 %v1979, 0.0
        %v2128 = vmax.f32 %v1981, 0.0
        %v2129 = vmax.f32 %v1984, 0.0
        %v2130 = vmax.f32 %v1986, 0.0
        %v2131 = vmax.f32 %v1989, 0.0
        %v2132 = vmax.f32 %v1991, 0.0
        %v2133 = vmax.f32 %v1994, 0.0
        %v2134 = vmax.f32 %v1996, 0.0
        %v2135 = vmax.f32 %v1999, 0.0
        %v2136 = vmax.f32 %v2001, 0.0
        %v2137 = vmax.f32 %v2004, 0.0
        %v2138 = vmax.f32 %v2006, 0.0
        %v2139 = vmax.f32 %v2009, 0.0
        %v2140 = vmax.f32 %v2011, 0.0
        %v2141 = vpack.c.bf16 %v2014, %v2013
        %v2142 = vpack.c.bf16 %v2016, %v2015
        %v2143 = vpack.c.bf16 %v2018, %v2017
        %v2144 = vpack.c.bf16 %v2020, %v2019
        %v2145 = vpack.c.bf16 %v2022, %v2021
        %v2146 = vpack.c.bf16 %v2024, %v2023
        %v2147 = vpack.c.bf16 %v2026, %v2025
        %v2148 = vpack.c.bf16 %v2028, %v2027
        %v2149 = vpack.c.bf16 %v2030, %v2029
        %v2150 = vpack.c.bf16 %v2032, %v2031
        %v2151 = vpack.c.bf16 %v2034, %v2033
        %v2152 = vpack.c.bf16 %v2036, %v2035
        %v2153 = vpack.c.bf16 %v2038, %v2037
        %v2154 = vpack.c.bf16 %v2040, %v2039
        %v2155 = vpack.c.bf16 %v2042, %v2041
        %v2156 = vpack.c.bf16 %v2044, %v2043
        %v2157 = vpack.c.bf16 %v2046, %v2045
        %v2158 = vpack.c.bf16 %v2048, %v2047
        %v2159 = vpack.c.bf16 %v2050, %v2049
        %v2160 = vpack.c.bf16 %v2052, %v2051
        %v2161 = vpack.c.bf16 %v2054, %v2053
        %v2162 = vpack.c.bf16 %v2056, %v2055
        %v2163 = vpack.c.bf16 %v2058, %v2057
        %v2164 = vpack.c.bf16 %v2060, %v2059
        %v2165 = vpack.c.bf16 %v2062, %v2061
        %v2166 = vpack.c.bf16 %v2064, %v2063
        %v2167 = vpack.c.bf16 %v2066, %v2065
        %v2168 = vpack.c.bf16 %v2068, %v2067
        %v2169 = vpack.c.bf16 %v2070, %v2069
        %v2170 = vpack.c.bf16 %v2072, %v2071
        %v2171 = vpack.c.bf16 %v2074, %v2073
        %v2172 = vpack.c.bf16 %v2076, %v2075
        %v2173 = vpack.c.bf16 %v2078, %v2077
        %v2174 = vpack.c.bf16 %v2080, %v2079
        %v2175 = vpack.c.bf16 %v2082, %v2081
        %v2176 = vpack.c.bf16 %v2084, %v2083
        %v2177 = vpack.c.bf16 %v2086, %v2085
        %v2178 = vpack.c.bf16 %v2088, %v2087
        %v2179 = vpack.c.bf16 %v2090, %v2089
        %v2180 = vpack.c.bf16 %v2092, %v2091
        %v2181 = vpack.c.bf16 %v2094, %v2093
        %v2182 = vpack.c.bf16 %v2096, %v2095
        %v2183 = vpack.c.bf16 %v2098, %v2097
        %v2184 = vpack.c.bf16 %v2100, %v2099
        %v2185 = vpack.c.bf16 %v2102, %v2101
        %v2186 = vpack.c.bf16 %v2104, %v2103
        %v2187 = vpack.c.bf16 %v2106, %v2105
        %v2188 = vpack.c.bf16 %v2108, %v2107
        %v2189 = vpack.c.bf16 %v2110, %v2109
        %v2190 = vpack.c.bf16 %v2112, %v2111
        %v2191 = vpack.c.bf16 %v2114, %v2113
        %v2192 = vpack.c.bf16 %v2116, %v2115
        %v2193 = vpack.c.bf16 %v2118, %v2117
        %v2194 = vpack.c.bf16 %v2120, %v2119
        %v2195 = vpack.c.bf16 %v2122, %v2121
        %v2196 = vpack.c.bf16 %v2124, %v2123
        %v2197 = vpack.c.bf16 %v2126, %v2125
        %v2198 = vpack.c.bf16 %v2128, %v2127
        %v2199 = vpack.c.bf16 %v2130, %v2129
        %v2200 = vpack.c.bf16 %v2132, %v2131
        %v2201 = vpack.c.bf16 %v2134, %v2133
        %v2202 = vpack.c.bf16 %v2136, %v2135
        %v2203 = vpack.c.bf16 %v2138, %v2137
        %v2204 = vpack.c.bf16 %v2140, %v2139
        %v2205 = vld [vmem:[%s5] sm:$0xf]
        %v2206 = vld [vmem:[%s5 + $0x4] sm:$0xf]
        %v2207 = vld [vmem:[%s5 + $0x8] sm:$0xf]
        %v2208 = vld [vmem:[%s5 + $0xc] sm:$0xf]
        %v2209 = vld [vmem:[%s5 + $0x10] sm:$0xf]
        %v2210 = vld [vmem:[%s5 + $0x14] sm:$0xf]
        %v2211 = vld [vmem:[%s5 + $0x18] sm:$0xf]
        %v2212 = vld [vmem:[%s5 + $0x1c] sm:$0xf]
        %v2221 = vunpack.c.l.b16 %v2205
        %v2222 = vunpack.c.l.b16 %v2206
        %v2223 = vunpack.c.l.b16 %v2207
        %v2224 = vunpack.c.l.b16 %v2208
        %v2225 = vunpack.c.l.b16 %v2209
        %v2226 = vunpack.c.l.b16 %v2210
        %v2227 = vunpack.c.l.b16 %v2211
        %v2228 = vunpack.c.l.b16 %v2212
        %v2229 = vpack.c.b16 %v2222, %v2221
        %v2230 = vpack.c.b16 %v2224, %v2223
        %v2231 = vpack.c.b16 %v2226, %v2225
        %v2232 = vpack.c.b16 %v2228, %v2227
        %v2238 = vsel %vm1491, %v2141, 0
        %v2241 = vsel %vm1491, %v2142, 0
        %v2244 = vsel %vm1491, %v2143, 0
        %v2247 = vsel %vm1491, %v2144, 0
        %v2250 = vsel %vm1491, %v2145, 0
        %v2253 = vsel %vm1491, %v2146, 0
        %v2256 = vsel %vm1491, %v2147, 0
        %v2259 = vsel %vm1491, %v2148, 0
        %v2262 = vsel %vm1491, %v2149, 0
        %v2265 = vsel %vm1491, %v2150, 0
        %v2268 = vsel %vm1491, %v2151, 0
        %v2271 = vsel %vm1491, %v2152, 0
        %v2274 = vsel %vm1491, %v2153, 0
        %v2277 = vsel %vm1491, %v2154, 0
        %v2280 = vsel %vm1491, %v2155, 0
        %v2283 = vsel %vm1491, %v2156, 0
        %v2286 = vsel %vm1491, %v2157, 0
        %v2289 = vsel %vm1491, %v2158, 0
        %v2292 = vsel %vm1491, %v2159, 0
        %v2295 = vsel %vm1491, %v2160, 0
        %v2298 = vsel %vm1491, %v2161, 0
        %v2301 = vsel %vm1491, %v2162, 0
        %v2304 = vsel %vm1491, %v2163, 0
        %v2307 = vsel %vm1491, %v2164, 0
        %v2310 = vsel %vm1491, %v2165, 0
        %v2313 = vsel %vm1491, %v2166, 0
        %v2316 = vsel %vm1491, %v2167, 0
        %v2319 = vsel %vm1491, %v2168, 0
        %v2322 = vsel %vm1491, %v2169, 0
        %v2325 = vsel %vm1491, %v2170, 0
        %v2328 = vsel %vm1491, %v2171, 0
        %v2331 = vsel %vm1491, %v2172, 0
        %v2334 = vsel %vm1491, %v2173, 0
        %v2337 = vsel %vm1491, %v2174, 0
        %v2340 = vsel %vm1491, %v2175, 0
        %v2343 = vsel %vm1491, %v2176, 0
        %v2346 = vsel %vm1491, %v2177, 0
        %v2349 = vsel %vm1491, %v2178, 0
        %v2352 = vsel %vm1491, %v2179, 0
        %v2355 = vsel %vm1491, %v2180, 0
        %v2358 = vsel %vm1491, %v2181, 0
        %v2361 = vsel %vm1491, %v2182, 0
        %v2364 = vsel %vm1491, %v2183, 0
        %v2367 = vsel %vm1491, %v2184, 0
        %v2370 = vsel %vm1491, %v2185, 0
        %v2373 = vsel %vm1491, %v2186, 0
        %v2376 = vsel %vm1491, %v2187, 0
        %v2379 = vsel %vm1491, %v2188, 0
        %v2382 = vsel %vm1491, %v2189, 0
        %v2385 = vsel %vm1491, %v2190, 0
        %v2388 = vsel %vm1491, %v2191, 0
        %v2391 = vsel %vm1491, %v2192, 0
        %v2394 = vsel %vm1491, %v2193, 0
        %v2397 = vsel %vm1491, %v2194, 0
        %v2400 = vsel %vm1491, %v2195, 0
        %v2403 = vsel %vm1491, %v2196, 0
        %v2406 = vsel %vm1491, %v2197, 0
        %v2409 = vsel %vm1491, %v2198, 0
        %v2412 = vsel %vm1491, %v2199, 0
        %v2415 = vsel %vm1491, %v2200, 0
        %v2418 = vsel %vm1491, %v2201, 0
        %v2421 = vsel %vm1491, %v2202, 0
        %v2424 = vsel %vm1491, %v2203, 0
        %v2427 = vsel %vm1491, %v2204, 0
        %2429 = vmatpush.bf16.msra.mxu0 0
        %2430 = vmatpush.bf16.msra.mxu0 0
        %2431 = vmatpush.bf16.msra.mxu0 0
        %2432 = vmatpush.bf16.msra.mxu0 0
        %2433 = vmatpush.bf16.msra.mxu0 %v2232
        %2434 = vmatpush.bf16.msra.mxu0 %v2231
        %2435 = vmatpush.bf16.msra.mxu0 %v2230
        %2436 = vmatpush.bf16.msra.mxu0 %v2229
        %2437 = vmatmul.bf16.gmra.mxu0 %v2238
        %v2438 = vpop.f32.mrf.mxu0
        %v2439 = vadd.f32 0.0, %v2438
        %v2440 = vpop.f32.mrf.mxu0
        %v2441 = vadd.f32 0.0, %v2440
        %2442 = vmatmul.bf16.gmra.mxu0 %v2241
        %v2443 = vpop.f32.mrf.mxu0
        %v2444 = vadd.f32 0.0, %v2443
        %v2445 = vpop.f32.mrf.mxu0
        %v2446 = vadd.f32 0.0, %v2445
        %2447 = vmatmul.bf16.gmra.mxu0 %v2244
        %v2448 = vpop.f32.mrf.mxu0
        %v2449 = vadd.f32 0.0, %v2448
        %v2450 = vpop.f32.mrf.mxu0
        %v2451 = vadd.f32 0.0, %v2450
        %2452 = vmatmul.bf16.gmra.mxu0 %v2247
        %v2453 = vpop.f32.mrf.mxu0
        %v2454 = vadd.f32 0.0, %v2453
        %v2455 = vpop.f32.mrf.mxu0
        %v2456 = vadd.f32 0.0, %v2455
        %2457 = vmatmul.bf16.gmra.mxu0 %v2250
        %v2458 = vpop.f32.mrf.mxu0
        %v2459 = vadd.f32 0.0, %v2458
        %v2460 = vpop.f32.mrf.mxu0
        %v2461 = vadd.f32 0.0, %v2460
        %2462 = vmatmul.bf16.gmra.mxu0 %v2253
        %v2463 = vpop.f32.mrf.mxu0
        %v2464 = vadd.f32 0.0, %v2463
        %v2465 = vpop.f32.mrf.mxu0
        %v2466 = vadd.f32 0.0, %v2465
        %2467 = vmatmul.bf16.gmra.mxu0 %v2256
        %v2468 = vpop.f32.mrf.mxu0
        %v2469 = vadd.f32 0.0, %v2468
        %v2470 = vpop.f32.mrf.mxu0
        %v2471 = vadd.f32 0.0, %v2470
        %2472 = vmatmul.bf16.gmra.mxu0 %v2259
        %v2473 = vpop.f32.mrf.mxu0
        %v2474 = vadd.f32 0.0, %v2473
        %v2475 = vpop.f32.mrf.mxu0
        %v2476 = vadd.f32 0.0, %v2475
        %2477 = vmatmul.bf16.gmra.mxu0 %v2262
        %v2478 = vpop.f32.mrf.mxu0
        %v2479 = vadd.f32 0.0, %v2478
        %v2480 = vpop.f32.mrf.mxu0
        %v2481 = vadd.f32 0.0, %v2480
        %2482 = vmatmul.bf16.gmra.mxu0 %v2265
        %v2483 = vpop.f32.mrf.mxu0
        %v2484 = vadd.f32 0.0, %v2483
        %v2485 = vpop.f32.mrf.mxu0
        %v2486 = vadd.f32 0.0, %v2485
        %2487 = vmatmul.bf16.gmra.mxu0 %v2268
        %v2488 = vpop.f32.mrf.mxu0
        %v2489 = vadd.f32 0.0, %v2488
        %v2490 = vpop.f32.mrf.mxu0
        %v2491 = vadd.f32 0.0, %v2490
        %2492 = vmatmul.bf16.gmra.mxu0 %v2271
        %v2493 = vpop.f32.mrf.mxu0
        %v2494 = vadd.f32 0.0, %v2493
        %v2495 = vpop.f32.mrf.mxu0
        %v2496 = vadd.f32 0.0, %v2495
        %2497 = vmatmul.bf16.gmra.mxu0 %v2274
        %v2498 = vpop.f32.mrf.mxu0
        %v2499 = vadd.f32 0.0, %v2498
        %v2500 = vpop.f32.mrf.mxu0
        %v2501 = vadd.f32 0.0, %v2500
        %2502 = vmatmul.bf16.gmra.mxu0 %v2277
        %v2503 = vpop.f32.mrf.mxu0
        %v2504 = vadd.f32 0.0, %v2503
        %v2505 = vpop.f32.mrf.mxu0
        %v2506 = vadd.f32 0.0, %v2505
        %2507 = vmatmul.bf16.gmra.mxu0 %v2280
        %v2508 = vpop.f32.mrf.mxu0
        %v2509 = vadd.f32 0.0, %v2508
        %v2510 = vpop.f32.mrf.mxu0
        %v2511 = vadd.f32 0.0, %v2510
        %2512 = vmatmul.bf16.gmra.mxu0 %v2283
        %v2513 = vpop.f32.mrf.mxu0
        %v2514 = vadd.f32 0.0, %v2513
        %v2515 = vpop.f32.mrf.mxu0
        %v2516 = vadd.f32 0.0, %v2515
        %2517 = vmatmul.bf16.gmra.mxu0 %v2286
        %v2518 = vpop.f32.mrf.mxu0
        %v2519 = vadd.f32 0.0, %v2518
        %v2520 = vpop.f32.mrf.mxu0
        %v2521 = vadd.f32 0.0, %v2520
        %2522 = vmatmul.bf16.gmra.mxu0 %v2289
        %v2523 = vpop.f32.mrf.mxu0
        %v2524 = vadd.f32 0.0, %v2523
        %v2525 = vpop.f32.mrf.mxu0
        %v2526 = vadd.f32 0.0, %v2525
        %2527 = vmatmul.bf16.gmra.mxu0 %v2292
        %v2528 = vpop.f32.mrf.mxu0
        %v2529 = vadd.f32 0.0, %v2528
        %v2530 = vpop.f32.mrf.mxu0
        %v2531 = vadd.f32 0.0, %v2530
        %2532 = vmatmul.bf16.gmra.mxu0 %v2295
        %v2533 = vpop.f32.mrf.mxu0
        %v2534 = vadd.f32 0.0, %v2533
        %v2535 = vpop.f32.mrf.mxu0
        %v2536 = vadd.f32 0.0, %v2535
        %2537 = vmatmul.bf16.gmra.mxu0 %v2298
        %v2538 = vpop.f32.mrf.mxu0
        %v2539 = vadd.f32 0.0, %v2538
        %v2540 = vpop.f32.mrf.mxu0
        %v2541 = vadd.f32 0.0, %v2540
        %2542 = vmatmul.bf16.gmra.mxu0 %v2301
        %v2543 = vpop.f32.mrf.mxu0
        %v2544 = vadd.f32 0.0, %v2543
        %v2545 = vpop.f32.mrf.mxu0
        %v2546 = vadd.f32 0.0, %v2545
        %2547 = vmatmul.bf16.gmra.mxu0 %v2304
        %v2548 = vpop.f32.mrf.mxu0
        %v2549 = vadd.f32 0.0, %v2548
        %v2550 = vpop.f32.mrf.mxu0
        %v2551 = vadd.f32 0.0, %v2550
        %2552 = vmatmul.bf16.gmra.mxu0 %v2307
        %v2553 = vpop.f32.mrf.mxu0
        %v2554 = vadd.f32 0.0, %v2553
        %v2555 = vpop.f32.mrf.mxu0
        %v2556 = vadd.f32 0.0, %v2555
        %2557 = vmatmul.bf16.gmra.mxu0 %v2310
        %v2558 = vpop.f32.mrf.mxu0
        %v2559 = vadd.f32 0.0, %v2558
        %v2560 = vpop.f32.mrf.mxu0
        %v2561 = vadd.f32 0.0, %v2560
        %2562 = vmatmul.bf16.gmra.mxu0 %v2313
        %v2563 = vpop.f32.mrf.mxu0
        %v2564 = vadd.f32 0.0, %v2563
        %v2565 = vpop.f32.mrf.mxu0
        %v2566 = vadd.f32 0.0, %v2565
        %2567 = vmatmul.bf16.gmra.mxu0 %v2316
        %v2568 = vpop.f32.mrf.mxu0
        %v2569 = vadd.f32 0.0, %v2568
        %v2570 = vpop.f32.mrf.mxu0
        %v2571 = vadd.f32 0.0, %v2570
        %2572 = vmatmul.bf16.gmra.mxu0 %v2319
        %v2573 = vpop.f32.mrf.mxu0
        %v2574 = vadd.f32 0.0, %v2573
        %v2575 = vpop.f32.mrf.mxu0
        %v2576 = vadd.f32 0.0, %v2575
        %2577 = vmatmul.bf16.gmra.mxu0 %v2322
        %v2578 = vpop.f32.mrf.mxu0
        %v2579 = vadd.f32 0.0, %v2578
        %v2580 = vpop.f32.mrf.mxu0
        %v2581 = vadd.f32 0.0, %v2580
        %2582 = vmatmul.bf16.gmra.mxu0 %v2325
        %v2583 = vpop.f32.mrf.mxu0
        %v2584 = vadd.f32 0.0, %v2583
        %v2585 = vpop.f32.mrf.mxu0
        %v2586 = vadd.f32 0.0, %v2585
        %2587 = vmatmul.bf16.gmra.mxu0 %v2328
        %v2588 = vpop.f32.mrf.mxu0
        %v2589 = vadd.f32 0.0, %v2588
        %v2590 = vpop.f32.mrf.mxu0
        %v2591 = vadd.f32 0.0, %v2590
        %2592 = vmatmul.bf16.gmra.mxu0 %v2331
        %v2593 = vpop.f32.mrf.mxu0
        %v2594 = vadd.f32 0.0, %v2593
        %v2595 = vpop.f32.mrf.mxu0
        %v2596 = vadd.f32 0.0, %v2595
        %2597 = vmatmul.bf16.gmra.mxu0 %v2334
        %v2598 = vpop.f32.mrf.mxu0
        %v2599 = vadd.f32 0.0, %v2598
        %v2600 = vpop.f32.mrf.mxu0
        %v2601 = vadd.f32 0.0, %v2600
        %2602 = vmatmul.bf16.gmra.mxu0 %v2337
        %v2603 = vpop.f32.mrf.mxu0
        %v2604 = vadd.f32 0.0, %v2603
        %v2605 = vpop.f32.mrf.mxu0
        %v2606 = vadd.f32 0.0, %v2605
        %2607 = vmatmul.bf16.gmra.mxu0 %v2340
        %v2608 = vpop.f32.mrf.mxu0
        %v2609 = vadd.f32 0.0, %v2608
        %v2610 = vpop.f32.mrf.mxu0
        %v2611 = vadd.f32 0.0, %v2610
        %2612 = vmatmul.bf16.gmra.mxu0 %v2343
        %v2613 = vpop.f32.mrf.mxu0
        %v2614 = vadd.f32 0.0, %v2613
        %v2615 = vpop.f32.mrf.mxu0
        %v2616 = vadd.f32 0.0, %v2615
        %2617 = vmatmul.bf16.gmra.mxu0 %v2346
        %v2618 = vpop.f32.mrf.mxu0
        %v2619 = vadd.f32 0.0, %v2618
        %v2620 = vpop.f32.mrf.mxu0
        %v2621 = vadd.f32 0.0, %v2620
        %2622 = vmatmul.bf16.gmra.mxu0 %v2349
        %v2623 = vpop.f32.mrf.mxu0
        %v2624 = vadd.f32 0.0, %v2623
        %v2625 = vpop.f32.mrf.mxu0
        %v2626 = vadd.f32 0.0, %v2625
        %2627 = vmatmul.bf16.gmra.mxu0 %v2352
        %v2628 = vpop.f32.mrf.mxu0
        %v2629 = vadd.f32 0.0, %v2628
        %v2630 = vpop.f32.mrf.mxu0
        %v2631 = vadd.f32 0.0, %v2630
        %2632 = vmatmul.bf16.gmra.mxu0 %v2355
        %v2633 = vpop.f32.mrf.mxu0
        %v2634 = vadd.f32 0.0, %v2633
        %v2635 = vpop.f32.mrf.mxu0
        %v2636 = vadd.f32 0.0, %v2635
        %2637 = vmatmul.bf16.gmra.mxu0 %v2358
        %v2638 = vpop.f32.mrf.mxu0
        %v2639 = vadd.f32 0.0, %v2638
        %v2640 = vpop.f32.mrf.mxu0
        %v2641 = vadd.f32 0.0, %v2640
        %2642 = vmatmul.bf16.gmra.mxu0 %v2361
        %v2643 = vpop.f32.mrf.mxu0
        %v2644 = vadd.f32 0.0, %v2643
        %v2645 = vpop.f32.mrf.mxu0
        %v2646 = vadd.f32 0.0, %v2645
        %2647 = vmatmul.bf16.gmra.mxu0 %v2364
        %v2648 = vpop.f32.mrf.mxu0
        %v2649 = vadd.f32 0.0, %v2648
        %v2650 = vpop.f32.mrf.mxu0
        %v2651 = vadd.f32 0.0, %v2650
        %2652 = vmatmul.bf16.gmra.mxu0 %v2367
        %v2653 = vpop.f32.mrf.mxu0
        %v2654 = vadd.f32 0.0, %v2653
        %v2655 = vpop.f32.mrf.mxu0
        %v2656 = vadd.f32 0.0, %v2655
        %2657 = vmatmul.bf16.gmra.mxu0 %v2370
        %v2658 = vpop.f32.mrf.mxu0
        %v2659 = vadd.f32 0.0, %v2658
        %v2660 = vpop.f32.mrf.mxu0
        %v2661 = vadd.f32 0.0, %v2660
        %2662 = vmatmul.bf16.gmra.mxu0 %v2373
        %v2663 = vpop.f32.mrf.mxu0
        %v2664 = vadd.f32 0.0, %v2663
        %v2665 = vpop.f32.mrf.mxu0
        %v2666 = vadd.f32 0.0, %v2665
        %2667 = vmatmul.bf16.gmra.mxu0 %v2376
        %v2668 = vpop.f32.mrf.mxu0
        %v2669 = vadd.f32 0.0, %v2668
        %v2670 = vpop.f32.mrf.mxu0
        %v2671 = vadd.f32 0.0, %v2670
        %2672 = vmatmul.bf16.gmra.mxu0 %v2379
        %v2673 = vpop.f32.mrf.mxu0
        %v2674 = vadd.f32 0.0, %v2673
        %v2675 = vpop.f32.mrf.mxu0
        %v2676 = vadd.f32 0.0, %v2675
        %2677 = vmatmul.bf16.gmra.mxu0 %v2382
        %v2678 = vpop.f32.mrf.mxu0
        %v2679 = vadd.f32 0.0, %v2678
        %v2680 = vpop.f32.mrf.mxu0
        %v2681 = vadd.f32 0.0, %v2680
        %2682 = vmatmul.bf16.gmra.mxu0 %v2385
        %v2683 = vpop.f32.mrf.mxu0
        %v2684 = vadd.f32 0.0, %v2683
        %v2685 = vpop.f32.mrf.mxu0
        %v2686 = vadd.f32 0.0, %v2685
        %2687 = vmatmul.bf16.gmra.mxu0 %v2388
        %v2688 = vpop.f32.mrf.mxu0
        %v2689 = vadd.f32 0.0, %v2688
        %v2690 = vpop.f32.mrf.mxu0
        %v2691 = vadd.f32 0.0, %v2690
        %2692 = vmatmul.bf16.gmra.mxu0 %v2391
        %v2693 = vpop.f32.mrf.mxu0
        %v2694 = vadd.f32 0.0, %v2693
        %v2695 = vpop.f32.mrf.mxu0
        %v2696 = vadd.f32 0.0, %v2695
        %2697 = vmatmul.bf16.gmra.mxu0 %v2394
        %v2698 = vpop.f32.mrf.mxu0
        %v2699 = vadd.f32 0.0, %v2698
        %v2700 = vpop.f32.mrf.mxu0
        %v2701 = vadd.f32 0.0, %v2700
        %2702 = vmatmul.bf16.gmra.mxu0 %v2397
        %v2703 = vpop.f32.mrf.mxu0
        %v2704 = vadd.f32 0.0, %v2703
        %v2705 = vpop.f32.mrf.mxu0
        %v2706 = vadd.f32 0.0, %v2705
        %2707 = vmatmul.bf16.gmra.mxu0 %v2400
        %v2708 = vpop.f32.mrf.mxu0
        %v2709 = vadd.f32 0.0, %v2708
        %v2710 = vpop.f32.mrf.mxu0
        %v2711 = vadd.f32 0.0, %v2710
        %2712 = vmatmul.bf16.gmra.mxu0 %v2403
        %v2713 = vpop.f32.mrf.mxu0
        %v2714 = vadd.f32 0.0, %v2713
        %v2715 = vpop.f32.mrf.mxu0
        %v2716 = vadd.f32 0.0, %v2715
        %2717 = vmatmul.bf16.gmra.mxu0 %v2406
        %v2718 = vpop.f32.mrf.mxu0
        %v2719 = vadd.f32 0.0, %v2718
        %v2720 = vpop.f32.mrf.mxu0
        %v2721 = vadd.f32 0.0, %v2720
        %2722 = vmatmul.bf16.gmra.mxu0 %v2409
        %v2723 = vpop.f32.mrf.mxu0
        %v2724 = vadd.f32 0.0, %v2723
        %v2725 = vpop.f32.mrf.mxu0
        %v2726 = vadd.f32 0.0, %v2725
        %2727 = vmatmul.bf16.gmra.mxu0 %v2412
        %v2728 = vpop.f32.mrf.mxu0
        %v2729 = vadd.f32 0.0, %v2728
        %v2730 = vpop.f32.mrf.mxu0
        %v2731 = vadd.f32 0.0, %v2730
        %2732 = vmatmul.bf16.gmra.mxu0 %v2415
        %v2733 = vpop.f32.mrf.mxu0
        %v2734 = vadd.f32 0.0, %v2733
        %v2735 = vpop.f32.mrf.mxu0
        %v2736 = vadd.f32 0.0, %v2735
        %2737 = vmatmul.bf16.gmra.mxu0 %v2418
        %v2738 = vpop.f32.mrf.mxu0
        %v2739 = vadd.f32 0.0, %v2738
        %v2740 = vpop.f32.mrf.mxu0
        %v2741 = vadd.f32 0.0, %v2740
        %2742 = vmatmul.bf16.gmra.mxu0 %v2421
        %v2743 = vpop.f32.mrf.mxu0
        %v2744 = vadd.f32 0.0, %v2743
        %v2745 = vpop.f32.mrf.mxu0
        %v2746 = vadd.f32 0.0, %v2745
        %2747 = vmatmul.bf16.gmra.mxu0 %v2424
        %v2748 = vpop.f32.mrf.mxu0
        %v2749 = vadd.f32 0.0, %v2748
        %v2750 = vpop.f32.mrf.mxu0
        %v2751 = vadd.f32 0.0, %v2750
        %2752 = vmatmul.bf16.gmra.mxu0 %v2427
        %v2753 = vpop.f32.mrf.mxu0
        %v2754 = vadd.f32 0.0, %v2753
        %v2755 = vpop.f32.mrf.mxu0
        %v2756 = vadd.f32 0.0, %v2755
        %2757 = vdwg.mxu0
        %v2758 = vmax.f32 %v2439, %v2441
        %v2759 = vmax.f32 %v2758, %v2444
        %v2760 = vmax.f32 %v2759, %v2446
        %v2761 = vrot.slane %v2760, 4
        %v2762 = vmax.f32 %v2760, %v2761
        %v2763 = vrot.slane %v2762, 2
        %v2764 = vmax.f32 %v2762, %v2763
        %v2765 = vrot.slane %v2764, 1
        %v2766 = vmax.f32 %v2764, %v2765
        %v2767 = vmax.f32 %v2449, %v2451
        %v2768 = vmax.f32 %v2767, %v2454
        %v2769 = vmax.f32 %v2768, %v2456
        %v2770 = vrot.slane %v2769, 4
        %v2771 = vmax.f32 %v2769, %v2770
        %v2772 = vrot.slane %v2771, 2
        %v2773 = vmax.f32 %v2771, %v2772
        %v2774 = vrot.slane %v2773, 1
        %v2775 = vmax.f32 %v2773, %v2774
        %v2776 = vmax.f32 %v2459, %v2461
        %v2777 = vmax.f32 %v2776, %v2464
        %v2778 = vmax.f32 %v2777, %v2466
        %v2779 = vrot.slane %v2778, 4
        %v2780 = vmax.f32 %v2778, %v2779
        %v2781 = vrot.slane %v2780, 2
        %v2782 = vmax.f32 %v2780, %v2781
        %v2783 = vrot.slane %v2782, 1
        %v2784 = vmax.f32 %v2782, %v2783
        %v2785 = vmax.f32 %v2469, %v2471
        %v2786 = vmax.f32 %v2785, %v2474
        %v2787 = vmax.f32 %v2786, %v2476
        %v2788 = vrot.slane %v2787, 4
        %v2789 = vmax.f32 %v2787, %v2788
        %v2790 = vrot.slane %v2789, 2
        %v2791 = vmax.f32 %v2789, %v2790
        %v2792 = vrot.slane %v2791, 1
        %v2793 = vmax.f32 %v2791, %v2792
        %v2794 = vmax.f32 %v2479, %v2481
        %v2795 = vmax.f32 %v2794, %v2484
        %v2796 = vmax.f32 %v2795, %v2486
        %v2797 = vrot.slane %v2796, 4
        %v2798 = vmax.f32 %v2796, %v2797
        %v2799 = vrot.slane %v2798, 2
        %v2800 = vmax.f32 %v2798, %v2799
        %v2801 = vrot.slane %v2800, 1
        %v2802 = vmax.f32 %v2800, %v2801
        %v2803 = vmax.f32 %v2489, %v2491
        %v2804 = vmax.f32 %v2803, %v2494
        %v2805 = vmax.f32 %v2804, %v2496
        %v2806 = vrot.slane %v2805, 4
        %v2807 = vmax.f32 %v2805, %v2806
        %v2808 = vrot.slane %v2807, 2
        %v2809 = vmax.f32 %v2807, %v2808
        %v2810 = vrot.slane %v2809, 1
        %v2811 = vmax.f32 %v2809, %v2810
        %v2812 = vmax.f32 %v2499, %v2501
        %v2813 = vmax.f32 %v2812, %v2504
        %v2814 = vmax.f32 %v2813, %v2506
        %v2815 = vrot.slane %v2814, 4
        %v2816 = vmax.f32 %v2814, %v2815
        %v2817 = vrot.slane %v2816, 2
        %v2818 = vmax.f32 %v2816, %v2817
        %v2819 = vrot.slane %v2818, 1
        %v2820 = vmax.f32 %v2818, %v2819
        %v2821 = vmax.f32 %v2509, %v2511
        %v2822 = vmax.f32 %v2821, %v2514
        %v2823 = vmax.f32 %v2822, %v2516
        %v2824 = vrot.slane %v2823, 4
        %v2825 = vmax.f32 %v2823, %v2824
        %v2826 = vrot.slane %v2825, 2
        %v2827 = vmax.f32 %v2825, %v2826
        %v2828 = vrot.slane %v2827, 1
        %v2829 = vmax.f32 %v2827, %v2828
        %v2830 = vmax.f32 %v2519, %v2521
        %v2831 = vmax.f32 %v2830, %v2524
        %v2832 = vmax.f32 %v2831, %v2526
        %v2833 = vrot.slane %v2832, 4
        %v2834 = vmax.f32 %v2832, %v2833
        %v2835 = vrot.slane %v2834, 2
        %v2836 = vmax.f32 %v2834, %v2835
        %v2837 = vrot.slane %v2836, 1
        %v2838 = vmax.f32 %v2836, %v2837
        %v2839 = vmax.f32 %v2529, %v2531
        %v2840 = vmax.f32 %v2839, %v2534
        %v2841 = vmax.f32 %v2840, %v2536
        %v2842 = vrot.slane %v2841, 4
        %v2843 = vmax.f32 %v2841, %v2842
        %v2844 = vrot.slane %v2843, 2
        %v2845 = vmax.f32 %v2843, %v2844
        %v2846 = vrot.slane %v2845, 1
        %v2847 = vmax.f32 %v2845, %v2846
        %v2848 = vmax.f32 %v2539, %v2541
        %v2849 = vmax.f32 %v2848, %v2544
        %v2850 = vmax.f32 %v2849, %v2546
        %v2851 = vrot.slane %v2850, 4
        %v2852 = vmax.f32 %v2850, %v2851
        %v2853 = vrot.slane %v2852, 2
        %v2854 = vmax.f32 %v2852, %v2853
        %v2855 = vrot.slane %v2854, 1
        %v2856 = vmax.f32 %v2854, %v2855
        %v2857 = vmax.f32 %v2549, %v2551
        %v2858 = vmax.f32 %v2857, %v2554
        %v2859 = vmax.f32 %v2858, %v2556
        %v2860 = vrot.slane %v2859, 4
        %v2861 = vmax.f32 %v2859, %v2860
        %v2862 = vrot.slane %v2861, 2
        %v2863 = vmax.f32 %v2861, %v2862
        %v2864 = vrot.slane %v2863, 1
        %v2865 = vmax.f32 %v2863, %v2864
        %v2866 = vmax.f32 %v2559, %v2561
        %v2867 = vmax.f32 %v2866, %v2564
        %v2868 = vmax.f32 %v2867, %v2566
        %v2869 = vrot.slane %v2868, 4
        %v2870 = vmax.f32 %v2868, %v2869
        %v2871 = vrot.slane %v2870, 2
        %v2872 = vmax.f32 %v2870, %v2871
        %v2873 = vrot.slane %v2872, 1
        %v2874 = vmax.f32 %v2872, %v2873
        %v2875 = vmax.f32 %v2569, %v2571
        %v2876 = vmax.f32 %v2875, %v2574
        %v2877 = vmax.f32 %v2876, %v2576
        %v2878 = vrot.slane %v2877, 4
        %v2879 = vmax.f32 %v2877, %v2878
        %v2880 = vrot.slane %v2879, 2
        %v2881 = vmax.f32 %v2879, %v2880
        %v2882 = vrot.slane %v2881, 1
        %v2883 = vmax.f32 %v2881, %v2882
        %v2884 = vmax.f32 %v2579, %v2581
        %v2885 = vmax.f32 %v2884, %v2584
        %v2886 = vmax.f32 %v2885, %v2586
        %v2887 = vrot.slane %v2886, 4
        %v2888 = vmax.f32 %v2886, %v2887
        %v2889 = vrot.slane %v2888, 2
        %v2890 = vmax.f32 %v2888, %v2889
        %v2891 = vrot.slane %v2890, 1
        %v2892 = vmax.f32 %v2890, %v2891
        %v2893 = vmax.f32 %v2589, %v2591
        %v2894 = vmax.f32 %v2893, %v2594
        %v2895 = vmax.f32 %v2894, %v2596
        %v2896 = vrot.slane %v2895, 4
        %v2897 = vmax.f32 %v2895, %v2896
        %v2898 = vrot.slane %v2897, 2
        %v2899 = vmax.f32 %v2897, %v2898
        %v2900 = vrot.slane %v2899, 1
        %v2901 = vmax.f32 %v2899, %v2900
        %v2902 = vmax.f32 %v2599, %v2601
        %v2903 = vmax.f32 %v2902, %v2604
        %v2904 = vmax.f32 %v2903, %v2606
        %v2905 = vrot.slane %v2904, 4
        %v2906 = vmax.f32 %v2904, %v2905
        %v2907 = vrot.slane %v2906, 2
        %v2908 = vmax.f32 %v2906, %v2907
        %v2909 = vrot.slane %v2908, 1
        %v2910 = vmax.f32 %v2908, %v2909
        %v2911 = vmax.f32 %v2609, %v2611
        %v2912 = vmax.f32 %v2911, %v2614
        %v2913 = vmax.f32 %v2912, %v2616
        %v2914 = vrot.slane %v2913, 4
        %v2915 = vmax.f32 %v2913, %v2914
        %v2916 = vrot.slane %v2915, 2
        %v2917 = vmax.f32 %v2915, %v2916
        %v2918 = vrot.slane %v2917, 1
        %v2919 = vmax.f32 %v2917, %v2918
        %v2920 = vmax.f32 %v2619, %v2621
        %v2921 = vmax.f32 %v2920, %v2624
        %v2922 = vmax.f32 %v2921, %v2626
        %v2923 = vrot.slane %v2922, 4
        %v2924 = vmax.f32 %v2922, %v2923
        %v2925 = vrot.slane %v2924, 2
        %v2926 = vmax.f32 %v2924, %v2925
        %v2927 = vrot.slane %v2926, 1
        %v2928 = vmax.f32 %v2926, %v2927
        %v2929 = vmax.f32 %v2629, %v2631
        %v2930 = vmax.f32 %v2929, %v2634
        %v2931 = vmax.f32 %v2930, %v2636
        %v2932 = vrot.slane %v2931, 4
        %v2933 = vmax.f32 %v2931, %v2932
        %v2934 = vrot.slane %v2933, 2
        %v2935 = vmax.f32 %v2933, %v2934
        %v2936 = vrot.slane %v2935, 1
        %v2937 = vmax.f32 %v2935, %v2936
        %v2938 = vmax.f32 %v2639, %v2641
        %v2939 = vmax.f32 %v2938, %v2644
        %v2940 = vmax.f32 %v2939, %v2646
        %v2941 = vrot.slane %v2940, 4
        %v2942 = vmax.f32 %v2940, %v2941
        %v2943 = vrot.slane %v2942, 2
        %v2944 = vmax.f32 %v2942, %v2943
        %v2945 = vrot.slane %v2944, 1
        %v2946 = vmax.f32 %v2944, %v2945
        %v2947 = vmax.f32 %v2649, %v2651
        %v2948 = vmax.f32 %v2947, %v2654
        %v2949 = vmax.f32 %v2948, %v2656
        %v2950 = vrot.slane %v2949, 4
        %v2951 = vmax.f32 %v2949, %v2950
        %v2952 = vrot.slane %v2951, 2
        %v2953 = vmax.f32 %v2951, %v2952
        %v2954 = vrot.slane %v2953, 1
        %v2955 = vmax.f32 %v2953, %v2954
        %v2956 = vmax.f32 %v2659, %v2661
        %v2957 = vmax.f32 %v2956, %v2664
        %v2958 = vmax.f32 %v2957, %v2666
        %v2959 = vrot.slane %v2958, 4
        %v2960 = vmax.f32 %v2958, %v2959
        %v2961 = vrot.slane %v2960, 2
        %v2962 = vmax.f32 %v2960, %v2961
        %v2963 = vrot.slane %v2962, 1
        %v2964 = vmax.f32 %v2962, %v2963
        %v2965 = vmax.f32 %v2669, %v2671
        %v2966 = vmax.f32 %v2965, %v2674
        %v2967 = vmax.f32 %v2966, %v2676
        %v2968 = vrot.slane %v2967, 4
        %v2969 = vmax.f32 %v2967, %v2968
        %v2970 = vrot.slane %v2969, 2
        %v2971 = vmax.f32 %v2969, %v2970
        %v2972 = vrot.slane %v2971, 1
        %v2973 = vmax.f32 %v2971, %v2972
        %v2974 = vmax.f32 %v2679, %v2681
        %v2975 = vmax.f32 %v2974, %v2684
        %v2976 = vmax.f32 %v2975, %v2686
        %v2977 = vrot.slane %v2976, 4
        %v2978 = vmax.f32 %v2976, %v2977
        %v2979 = vrot.slane %v2978, 2
        %v2980 = vmax.f32 %v2978, %v2979
        %v2981 = vrot.slane %v2980, 1
        %v2982 = vmax.f32 %v2980, %v2981
        %v2983 = vmax.f32 %v2689, %v2691
        %v2984 = vmax.f32 %v2983, %v2694
        %v2985 = vmax.f32 %v2984, %v2696
        %v2986 = vrot.slane %v2985, 4
        %v2987 = vmax.f32 %v2985, %v2986
        %v2988 = vrot.slane %v2987, 2
        %v2989 = vmax.f32 %v2987, %v2988
        %v2990 = vrot.slane %v2989, 1
        %v2991 = vmax.f32 %v2989, %v2990
        %v2992 = vmax.f32 %v2699, %v2701
        %v2993 = vmax.f32 %v2992, %v2704
        %v2994 = vmax.f32 %v2993, %v2706
        %v2995 = vrot.slane %v2994, 4
        %v2996 = vmax.f32 %v2994, %v2995
        %v2997 = vrot.slane %v2996, 2
        %v2998 = vmax.f32 %v2996, %v2997
        %v2999 = vrot.slane %v2998, 1
        %v3000 = vmax.f32 %v2998, %v2999
        %v3001 = vmax.f32 %v2709, %v2711
        %v3002 = vmax.f32 %v3001, %v2714
        %v3003 = vmax.f32 %v3002, %v2716
        %v3004 = vrot.slane %v3003, 4
        %v3005 = vmax.f32 %v3003, %v3004
        %v3006 = vrot.slane %v3005, 2
        %v3007 = vmax.f32 %v3005, %v3006
        %v3008 = vrot.slane %v3007, 1
        %v3009 = vmax.f32 %v3007, %v3008
        %v3010 = vmax.f32 %v2719, %v2721
        %v3011 = vmax.f32 %v3010, %v2724
        %v3012 = vmax.f32 %v3011, %v2726
        %v3013 = vrot.slane %v3012, 4
        %v3014 = vmax.f32 %v3012, %v3013
        %v3015 = vrot.slane %v3014, 2
        %v3016 = vmax.f32 %v3014, %v3015
        %v3017 = vrot.slane %v3016, 1
        %v3018 = vmax.f32 %v3016, %v3017
        %v3019 = vmax.f32 %v2729, %v2731
        %v3020 = vmax.f32 %v3019, %v2734
        %v3021 = vmax.f32 %v3020, %v2736
        %v3022 = vrot.slane %v3021, 4
        %v3023 = vmax.f32 %v3021, %v3022
        %v3024 = vrot.slane %v3023, 2
        %v3025 = vmax.f32 %v3023, %v3024
        %v3026 = vrot.slane %v3025, 1
        %v3027 = vmax.f32 %v3025, %v3026
        %v3028 = vmax.f32 %v2739, %v2741
        %v3029 = vmax.f32 %v3028, %v2744
        %v3030 = vmax.f32 %v3029, %v2746
        %v3031 = vrot.slane %v3030, 4
        %v3032 = vmax.f32 %v3030, %v3031
        %v3033 = vrot.slane %v3032, 2
        %v3034 = vmax.f32 %v3032, %v3033
        %v3035 = vrot.slane %v3034, 1
        %v3036 = vmax.f32 %v3034, %v3035
        %v3037 = vmax.f32 %v2749, %v2751
        %v3038 = vmax.f32 %v3037, %v2754
        %v3039 = vmax.f32 %v3038, %v2756
        %v3040 = vrot.slane %v3039, 4
        %v3041 = vmax.f32 %v3039, %v3040
        %v3042 = vrot.slane %v3041, 2
        %v3043 = vmax.f32 %v3041, %v3042
        %v3044 = vrot.slane %v3043, 1
        %v3045 = vmax.f32 %v3043, %v3044
        %v3046 = vld [vmem:[%s6] sm:$0x1]
        %v3048 = vperm.slane %v3046, 0
        %v3050 = vadd.f32 %v2766, %v3048
        %v3051 = vadd.f32 %v2775, %v3048
        %v3052 = vadd.f32 %v2784, %v3048
        %v3053 = vadd.f32 %v2793, %v3048
        %v3054 = vadd.f32 %v2802, %v3048
        %v3055 = vadd.f32 %v2811, %v3048
        %v3056 = vadd.f32 %v2820, %v3048
        %v3057 = vadd.f32 %v2829, %v3048
        %v3058 = vadd.f32 %v2838, %v3048
        %v3059 = vadd.f32 %v2847, %v3048
        %v3060 = vadd.f32 %v2856, %v3048
        %v3061 = vadd.f32 %v2865, %v3048
        %v3062 = vadd.f32 %v2874, %v3048
        %v3063 = vadd.f32 %v2883, %v3048
        %v3064 = vadd.f32 %v2892, %v3048
        %v3065 = vadd.f32 %v2901, %v3048
        %v3066 = vadd.f32 %v2910, %v3048
        %v3067 = vadd.f32 %v2919, %v3048
        %v3068 = vadd.f32 %v2928, %v3048
        %v3069 = vadd.f32 %v2937, %v3048
        %v3070 = vadd.f32 %v2946, %v3048
        %v3071 = vadd.f32 %v2955, %v3048
        %v3072 = vadd.f32 %v2964, %v3048
        %v3073 = vadd.f32 %v2973, %v3048
        %v3074 = vadd.f32 %v2982, %v3048
        %v3075 = vadd.f32 %v2991, %v3048
        %v3076 = vadd.f32 %v3000, %v3048
        %v3077 = vadd.f32 %v3009, %v3048
        %v3078 = vadd.f32 %v3018, %v3048
        %v3079 = vadd.f32 %v3027, %v3048
        %v3080 = vadd.f32 %v3036, %v3048
        %v3081 = vadd.f32 %v3045, %v3048
        %v3082 = vmax.f32 %v3050, 0.0
        %v3083 = vmax.f32 %v3051, 0.0
        %v3084 = vmax.f32 %v3052, 0.0
        %v3085 = vmax.f32 %v3053, 0.0
        %v3086 = vmax.f32 %v3054, 0.0
        %v3087 = vmax.f32 %v3055, 0.0
        %v3088 = vmax.f32 %v3056, 0.0
        %v3089 = vmax.f32 %v3057, 0.0
        %v3090 = vmax.f32 %v3058, 0.0
        %v3091 = vmax.f32 %v3059, 0.0
        %v3092 = vmax.f32 %v3060, 0.0
        %v3093 = vmax.f32 %v3061, 0.0
        %v3094 = vmax.f32 %v3062, 0.0
        %v3095 = vmax.f32 %v3063, 0.0
        %v3096 = vmax.f32 %v3064, 0.0
        %v3097 = vmax.f32 %v3065, 0.0
        %v3098 = vmax.f32 %v3066, 0.0
        %v3099 = vmax.f32 %v3067, 0.0
        %v3100 = vmax.f32 %v3068, 0.0
        %v3101 = vmax.f32 %v3069, 0.0
        %v3102 = vmax.f32 %v3070, 0.0
        %v3103 = vmax.f32 %v3071, 0.0
        %v3104 = vmax.f32 %v3072, 0.0
        %v3105 = vmax.f32 %v3073, 0.0
        %v3106 = vmax.f32 %v3074, 0.0
        %v3107 = vmax.f32 %v3075, 0.0
        %v3108 = vmax.f32 %v3076, 0.0
        %v3109 = vmax.f32 %v3077, 0.0
        %v3110 = vmax.f32 %v3078, 0.0
        %v3111 = vmax.f32 %v3079, 0.0
        %v3112 = vmax.f32 %v3080, 0.0
        %v3113 = vmax.f32 %v3081, 0.0
        %v3114 = vpack.c.bf16 %v3082, %v3082
        %v3115 = vpack.c.bf16 %v3083, %v3083
        %v3116 = vpack.c.bf16 %v3084, %v3084
        %v3117 = vpack.c.bf16 %v3085, %v3085
        %v3118 = vpack.c.bf16 %v3086, %v3086
        %v3119 = vpack.c.bf16 %v3087, %v3087
        %v3120 = vpack.c.bf16 %v3088, %v3088
        %v3121 = vpack.c.bf16 %v3089, %v3089
        %v3122 = vpack.c.bf16 %v3090, %v3090
        %v3123 = vpack.c.bf16 %v3091, %v3091
        %v3124 = vpack.c.bf16 %v3092, %v3092
        %v3125 = vpack.c.bf16 %v3093, %v3093
        %v3126 = vpack.c.bf16 %v3094, %v3094
        %v3127 = vpack.c.bf16 %v3095, %v3095
        %v3128 = vpack.c.bf16 %v3096, %v3096
        %v3129 = vpack.c.bf16 %v3097, %v3097
        %v3130 = vpack.c.bf16 %v3098, %v3098
        %v3131 = vpack.c.bf16 %v3099, %v3099
        %v3132 = vpack.c.bf16 %v3100, %v3100
        %v3133 = vpack.c.bf16 %v3101, %v3101
        %v3134 = vpack.c.bf16 %v3102, %v3102
        %v3135 = vpack.c.bf16 %v3103, %v3103
        %v3136 = vpack.c.bf16 %v3104, %v3104
        %v3137 = vpack.c.bf16 %v3105, %v3105
        %v3138 = vpack.c.bf16 %v3106, %v3106
        %v3139 = vpack.c.bf16 %v3107, %v3107
        %v3140 = vpack.c.bf16 %v3108, %v3108
        %v3141 = vpack.c.bf16 %v3109, %v3109
        %v3142 = vpack.c.bf16 %v3110, %v3110
        %v3143 = vpack.c.bf16 %v3111, %v3111
        %v3144 = vpack.c.bf16 %v3112, %v3112
        %v3145 = vpack.c.bf16 %v3113, %v3113
        %v3178 = vunpack.c.l.b16 %v3114
        %v3179 = vunpack.c.l.b16 %v3115
        %v3180 = vunpack.c.l.b16 %v3116
        %v3181 = vunpack.c.l.b16 %v3117
        %v3182 = vunpack.c.l.b16 %v3118
        %v3183 = vunpack.c.l.b16 %v3119
        %v3184 = vunpack.c.l.b16 %v3120
        %v3185 = vunpack.c.l.b16 %v3121
        %v3186 = vunpack.c.l.b16 %v3122
        %v3187 = vunpack.c.l.b16 %v3123
        %v3188 = vunpack.c.l.b16 %v3124
        %v3189 = vunpack.c.l.b16 %v3125
        %v3190 = vunpack.c.l.b16 %v3126
        %v3191 = vunpack.c.l.b16 %v3127
        %v3192 = vunpack.c.l.b16 %v3128
        %v3193 = vunpack.c.l.b16 %v3129
        %v3194 = vunpack.c.l.b16 %v3130
        %v3195 = vunpack.c.l.b16 %v3131
        %v3196 = vunpack.c.l.b16 %v3132
        %v3197 = vunpack.c.l.b16 %v3133
        %v3198 = vunpack.c.l.b16 %v3134
        %v3199 = vunpack.c.l.b16 %v3135
        %v3200 = vunpack.c.l.b16 %v3136
        %v3201 = vunpack.c.l.b16 %v3137
        %v3202 = vunpack.c.l.b16 %v3138
        %v3203 = vunpack.c.l.b16 %v3139
        %v3204 = vunpack.c.l.b16 %v3140
        %v3205 = vunpack.c.l.b16 %v3141
        %v3206 = vunpack.c.l.b16 %v3142
        %v3207 = vunpack.c.l.b16 %v3143
        %v3208 = vunpack.c.l.b16 %v3144
        %v3209 = vunpack.c.l.b16 %v3145
        %v3210 = vrot.slane %v3179, 7
        %vm3211 = vcmask 1041409
        %v3212 = vsel %vm3211, %v3210, %v3178
        %v3213 = vrot.slane %v3180, 6
        %vm3214 = vcmask 1042434
        %v3215 = vsel %vm3214, %v3213, %v3212
        %v3216 = vrot.slane %v3181, 5
        %vm3217 = vcmask 1043459
        %v3218 = vsel %vm3217, %v3216, %v3215
        %v3219 = vrot.slane %v3182, 4
        %vm3220 = vcmask 1044484
        %v3221 = vsel %vm3220, %v3219, %v3218
        %v3222 = vrot.slane %v3183, 3
        %vm3223 = vcmask 1045509
        %v3224 = vsel %vm3223, %v3222, %v3221
        %v3225 = vrot.slane %v3184, 2
        %vm3226 = vcmask 1046534
        %v3227 = vsel %vm3226, %v3225, %v3224
        %v3228 = vrot.slane %v3185, 1
        %vm3229 = vcmask 1047559
        %v3230 = vsel %vm3229, %v3228, %v3227
        %v3231 = vrot.slane %v3187, 7
        %v3232 = vsel %vm3211, %v3231, %v3186
        %v3233 = vrot.slane %v3188, 6
        %v3234 = vsel %vm3214, %v3233, %v3232
        %v3235 = vrot.slane %v3189, 5
        %v3236 = vsel %vm3217, %v3235, %v3234
        %v3237 = vrot.slane %v3190, 4
        %v3238 = vsel %vm3220, %v3237, %v3236
        %v3239 = vrot.slane %v3191, 3
        %v3240 = vsel %vm3223, %v3239, %v3238
        %v3241 = vrot.slane %v3192, 2
        %v3242 = vsel %vm3226, %v3241, %v3240
        %v3243 = vrot.slane %v3193, 1
        %v3244 = vsel %vm3229, %v3243, %v3242
        %v3245 = vrot.slane %v3195, 7
        %v3246 = vsel %vm3211, %v3245, %v3194
        %v3247 = vrot.slane %v3196, 6
        %v3248 = vsel %vm3214, %v3247, %v3246
        %v3249 = vrot.slane %v3197, 5
        %v3250 = vsel %vm3217, %v3249, %v3248
        %v3251 = vrot.slane %v3198, 4
        %v3252 = vsel %vm3220, %v3251, %v3250
        %v3253 = vrot.slane %v3199, 3
        %v3254 = vsel %vm3223, %v3253, %v3252
        %v3255 = vrot.slane %v3200, 2
        %v3256 = vsel %vm3226, %v3255, %v3254
        %v3257 = vrot.slane %v3201, 1
        %v3258 = vsel %vm3229, %v3257, %v3256
        %v3259 = vrot.slane %v3203, 7
        %v3260 = vsel %vm3211, %v3259, %v3202
        %v3261 = vrot.slane %v3204, 6
        %v3262 = vsel %vm3214, %v3261, %v3260
        %v3263 = vrot.slane %v3205, 5
        %v3264 = vsel %vm3217, %v3263, %v3262
        %v3265 = vrot.slane %v3206, 4
        %v3266 = vsel %vm3220, %v3265, %v3264
        %v3267 = vrot.slane %v3207, 3
        %v3268 = vsel %vm3223, %v3267, %v3266
        %v3269 = vrot.slane %v3208, 2
        %v3270 = vsel %vm3226, %v3269, %v3268
        %v3271 = vrot.slane %v3209, 1
        %v3272 = vsel %vm3229, %v3271, %v3270
        %v3273 = vpack.c.b16 %v3230, %v3230
        %v3274 = vpack.c.b16 %v3244, %v3244
        %v3275 = vpack.c.b16 %v3258, %v3258
        %v3276 = vpack.c.b16 %v3272, %v3272
        %3281 = vst [vmem:[%s272] sm:$0xf] %v3273
        %3282 = vst [vmem:[%s272 + $0x4] sm:$0xf] %v3274
        %3283 = vst [vmem:[%s272 + $0x8] sm:$0xf] %v3275
        %3284 = vst [vmem:[%s272 + $0xc] sm:$0xf] %v3276
        %s3285 = sand.u32 %s181, 1
        %s3286 = scalar_lea.sflag [#allocation3], %s3285
        %s3287 = sand.u32 %s181, 1
        %s3288 = smul.addr %s3287, 16
        %s3289 = scalar_lea.vmem [#allocation2], %s3288
        // Predicated region
        $region49: #{tpu_custom_call.1} parent=47 // pred_check
          %p3290 = pneg %p191
        $region50: #{tpu_custom_call.1} parent=47 // pred_check_branch
          %3292 = sbr.rel (%p3290) target = $region52
        $region51: #{tpu_custom_call.1} parent=47 // pred_region
          %s3293 = smul.u32 4, %s21
          %3295 = vsyncadd %s3286, 0
          %s3296 = smul.addr %s3293, 4
          %s3297 = scalar_lea.hbm %s7, %s3296
          %s3298 = sshll.u32 %s3289, 4
          %s3299 = int_to_ptr.vmem [resolvable:$true] %s3298
          %s3300 = sshll.u32 %s3297, 4
          %s3301 = int_to_ptr.hbm [resolvable:$true] %s3300
          %3306 = dma.vmem_to_hbm [thread:$0]  %s3299, 256, %s3301, %s3286, 64, 64, 4
        $region52: #{tpu_custom_call.1} parent=47 // pred_fallthru
          _
      $region48: #{tpu_custom_call.1} parent=5 // pred_fallthru
        _
      %p3307 = scmp.le.s32.totalorder 2, %s16
      // Predicated region
      $region53: #{tpu_custom_call.1} parent=5 // pred_check
        %p3308 = pneg %p3307
      $region54: #{tpu_custom_call.1} parent=5 // pred_check_branch
        %3310 = sbr.rel (%p3308) target = $region56
      $region55: #{tpu_custom_call.1} parent=5 // pred_region
        %s3311 = ssub.s32 %s16, 2
        // Predicated region
        $region57: #{tpu_custom_call.1} parent=55 // pred_check
          %p3312 = pneg %p197
        $region58: #{tpu_custom_call.1} parent=55 // pred_check_branch
          %3314 = sbr.rel (%p3312) target = $region60
        $region59: #{tpu_custom_call.1} parent=55 // pred_region
          %s3315 = sand.u32 %s182, 1
          %s3316 = scalar_lea.sflag [#allocation3], %s3315
          %s3317 = sand.u32 %s182, 1
          %s3318 = smul.addr %s3317, 16
          %s3319 = scalar_lea.vmem [#allocation2], %s3318
          %3321 = dma.done %s3316, 256
        $region60: #{tpu_custom_call.1} parent=55 // pred_fallthru
          _
      $region56: #{tpu_custom_call.1} parent=5 // pred_fallthru
        _
    $region6: #{tpu_custom_call.1} parent=1 // loop_footer
      %s20 = sadd.s32 1, %s16
    $region7: #{tpu_custom_call.1} parent=1 // loop_footer_branch
      %15 = sbr.rel target = $region3
    $region8: #{tpu_custom_call.1} parent=1 // loop_exit
      _
    %3322 = vsyncpa [#allocation3], 1
    %s3323 = scalar_lea.sflag [#allocation3], 1
    %3324 = vsyncpa %s3323, 1

</llo_original>
